<compile_context>
chip_gen: v7x
topology: tpu7x:2x2x1
jax: 0.10.0
libtpu: 0.0.40
codegen_flags: <defaults>
</compile_context>

<pallas_src>
import functools

import jax
import jax.numpy as jnp
from jax.experimental import pallas as pl
from jax.experimental.pallas import tpu as pltpu

ENC_DIM = 3
ENC_PAD = 128            # lane-dense width for the encoder output
IMG_DIM = 28 * 28        # 784


def _round_up(x, m):
    return (x + m - 1) // m * m


def _ae_kernel(x_ref,
               w1, b1, w2, b2, w3, b3, w4, b4,      # encoder params
               w5, b5, w6, b6, w7, b7, w8, b8,      # decoder params
               enc_ref, dec_ref):
    f32 = jnp.float32
    x = x_ref[...].astype(f32)

    def lin(h, w, b):
        return jnp.dot(h, w[...], preferred_element_type=f32) + b[...]

    # ---- encoder: 784 -> 128 -> 64 -> 12 -> 3(+125 zero pad lanes)
    h = jnp.tanh(lin(x, w1, b1))
    h = jnp.tanh(lin(h, w2, b2))
    h = jnp.tanh(lin(h, w3, b3))
    enc = lin(h, w4, b4)                 # (tile, 128); cols 3.. are exactly 0
    enc_ref[...] = enc.astype(enc_ref.dtype)

    # ---- decoder: 3 -> 12 -> 64 -> 128 -> 784
    # w5 has zero rows 3..127, so consuming the padded enc is exact.
    h = jnp.tanh(lin(enc, w5, b5))
    h = jnp.tanh(lin(h, w6, b6))
    h = jnp.tanh(lin(h, w7, b7))
    dec = lin(h, w8, b8)
    dec_ref[...] = dec.astype(dec_ref.dtype)


def autoencoder_forward(x, params, *, batch_tile=512):
    """x: [B, 784] float32.  params: list of 8 (W[in,out], b[1,out]) pairs.

    Returns (encoded [B, 3], decoded [B, 784]).
    """
    B, D_in = x.shape
    assert D_in == IMG_DIM
    assert len(params) == 8

    # Clamp the tile to the (sublane-rounded) batch so small batches still
    # work, then pad the batch up to a whole number of tiles.
    bt = min(batch_tile, _round_up(B, 8))
    bt = _round_up(bt, 8)
    Bp = _round_up(B, bt)
    if Bp != B:
        x = jnp.pad(x, ((0, Bp - B), (0, 0)))
    grid = (Bp // bt,)

    # ---- lane-dense padding of the encoder head / decoder first layer.
    w4, b4 = params[3]
    w5, b5 = params[4]
    pad_cols = ENC_PAD - ENC_DIM
    w4p = jnp.pad(w4, ((0, 0), (0, pad_cols)))   # (12, 128)
    b4p = jnp.pad(b4, ((0, 0), (0, pad_cols)))   # (1, 128)
    w5p = jnp.pad(w5, ((0, pad_cols), (0, 0)))   # (128, 12)
    kernel_params = list(params)
    kernel_params[3] = (w4p, b4p)
    kernel_params[4] = (w5p, b5)

    # x tile walks the batch axis; weights/biases are replicated across grid.
    x_spec = pl.BlockSpec((bt, D_in), lambda i: (i, 0))
    param_specs = []
    flat_params = []
    for (w, b) in kernel_params:
        param_specs.append(pl.BlockSpec(w.shape, lambda i: (0, 0)))
        param_specs.append(pl.BlockSpec(b.shape, lambda i: (0, 0)))
        flat_params.extend([w, b])

    dec_dim = params[7][0].shape[1]   # 784

    out_shapes = (
        jax.ShapeDtypeStruct((Bp, ENC_PAD), x.dtype),
        jax.ShapeDtypeStruct((Bp, dec_dim), x.dtype),
    )
    out_specs = [
        pl.BlockSpec((bt, ENC_PAD), lambda i: (i, 0)),
        pl.BlockSpec((bt, dec_dim), lambda i: (i, 0)),
    ]

    # Advisory cost estimate for XLA's scheduler.
    layer_dims = [(w.shape[0], w.shape[1]) for (w, _) in params]
    flops = 2 * Bp * sum(i * o for i, o in layer_dims)
    transcendentals = Bp * sum(o for idx, (_, o) in enumerate(layer_dims)
                               if idx not in (3, 7))
    bytes_accessed = 4 * (Bp * D_in + Bp * ENC_PAD + Bp * dec_dim
                          + sum(w.size + b.size for (w, b) in kernel_params))
    cost = pl.CostEstimate(flops=flops,
                           transcendentals=transcendentals,
                           bytes_accessed=bytes_accessed)

    enc_pad, dec = pl.pallas_call(
        _ae_kernel,
        out_shape=out_shapes,
        grid_spec=pltpu.PrefetchScalarGridSpec(
            num_scalar_prefetch=0,
            grid=grid,
            in_specs=[x_spec] + param_specs,
            out_specs=out_specs,
        ),
        compiler_params=pltpu.CompilerParams(
            dimension_semantics=("parallel",),
            vmem_limit_bytes=32 * 1024 * 1024),
        cost_estimate=cost,
    )(x, *flat_params)

    return enc_pad[:B, :ENC_DIM], dec[:B]


def init_params(key):
    """Deterministic init matching nn.Linear shapes (stored as [in, out])."""
    dims = [(IMG_DIM, 128), (128, 64), (64, 12), (12, 3),      # encoder
            (3, 12), (12, 64), (64, 128), (128, IMG_DIM)]       # decoder
    params = []
    for (fan_in, fan_out) in dims:
        key, kw, kb = jax.random.split(key, 3)
        bound = 1.0 / jnp.sqrt(fan_in)
        w = jax.random.uniform(kw, (fan_in, fan_out), jnp.float32, -bound, bound)
        b = jax.random.uniform(kb, (1, fan_out), jnp.float32, -bound, bound)
        params.append((w, b))
    return params


def reference_forward(x, params):
    h = x
    enc = None
    for idx, (w, b) in enumerate(params):
        h = h @ w + b
        if idx not in (3, 7):           # no tanh after encoder/decoder heads
            h = jnp.tanh(h)
        if idx == 3:
            enc = h
    return enc, h


if __name__ == "__main__":
    key = jax.random.PRNGKey(0)
    key, kx = jax.random.split(key)
    B = 16
    x = jax.random.normal(kx, (B, IMG_DIM), jnp.float32)

    params = init_params(key)

    fwd = jax.jit(functools.partial(autoencoder_forward, params=params))
    enc, dec = fwd(x)
    jax.block_until_ready((enc, dec))

    enc_ref, dec_ref = reference_forward(x, params)
    assert enc.shape == (B, ENC_DIM) and dec.shape == (B, IMG_DIM)
    assert jnp.allclose(enc, enc_ref, atol=1e-4, rtol=1e-4)
    assert jnp.allclose(dec, dec_ref, atol=1e-4, rtol=1e-4)

    print("KERNEL_OK")
</pallas_src>

<mosaic_0001>
module attributes {stable_mosaic.version = 11 : i64} {
  func.func @_ae_kernel(%arg0: i32, %arg1: memref<16x784xf32, #tpu.memory_space<vmem>>, %arg2: memref<784x128xf32, #tpu.memory_space<vmem>>, %arg3: memref<1x128xf32, #tpu.memory_space<vmem>>, %arg4: memref<128x64xf32, #tpu.memory_space<vmem>>, %arg5: memref<1x64xf32, #tpu.memory_space<vmem>>, %arg6: memref<64x12xf32, #tpu.memory_space<vmem>>, %arg7: memref<1x12xf32, #tpu.memory_space<vmem>>, %arg8: memref<12x128xf32, #tpu.memory_space<vmem>>, %arg9: memref<1x128xf32, #tpu.memory_space<vmem>>, %arg10: memref<128x12xf32, #tpu.memory_space<vmem>>, %arg11: memref<1x12xf32, #tpu.memory_space<vmem>>, %arg12: memref<12x64xf32, #tpu.memory_space<vmem>>, %arg13: memref<1x64xf32, #tpu.memory_space<vmem>>, %arg14: memref<64x128xf32, #tpu.memory_space<vmem>>, %arg15: memref<1x128xf32, #tpu.memory_space<vmem>>, %arg16: memref<128x784xf32, #tpu.memory_space<vmem>>, %arg17: memref<1x784xf32, #tpu.memory_space<vmem>>, %arg18: memref<16x128xf32, #tpu.memory_space<vmem>>, %arg19: memref<16x784xf32, #tpu.memory_space<vmem>>) attributes {dimension_semantics = [#tpu.dimension_semantics<parallel>], iteration_bounds = array<i64: 1>, scalar_prefetch = 0 : i64, scratch_operands = 0 : i64, tpu.core_type = #tpu.core_type<tc>, window_params = [{transform_indices = @transform_0, window_bounds = array<i64: 16, 784>}, {pipeline_mode = #tpu.pipeline_mode<synchronous>, transform_indices = @transform_1, window_bounds = array<i64: 784, 128>}, {pipeline_mode = #tpu.pipeline_mode<synchronous>, transform_indices = @transform_2, window_bounds = array<i64: 1, 128>}, {pipeline_mode = #tpu.pipeline_mode<synchronous>, transform_indices = @transform_3, window_bounds = array<i64: 128, 64>}, {pipeline_mode = #tpu.pipeline_mode<synchronous>, transform_indices = @transform_4, window_bounds = array<i64: 1, 64>}, {pipeline_mode = #tpu.pipeline_mode<synchronous>, transform_indices = @transform_5, window_bounds = array<i64: 64, 12>}, {pipeline_mode = #tpu.pipeline_mode<synchronous>, transform_indices = @transform_6, window_bounds = array<i64: 1, 12>}, {pipeline_mode = #tpu.pipeline_mode<synchronous>, transform_indices = @transform_7, window_bounds = array<i64: 12, 128>}, {pipeline_mode = #tpu.pipeline_mode<synchronous>, transform_indices = @transform_8, window_bounds = array<i64: 1, 128>}, {pipeline_mode = #tpu.pipeline_mode<synchronous>, transform_indices = @transform_9, window_bounds = array<i64: 128, 12>}, {pipeline_mode = #tpu.pipeline_mode<synchronous>, transform_indices = @transform_10, window_bounds = array<i64: 1, 12>}, {pipeline_mode = #tpu.pipeline_mode<synchronous>, transform_indices = @transform_11, window_bounds = array<i64: 12, 64>}, {pipeline_mode = #tpu.pipeline_mode<synchronous>, transform_indices = @transform_12, window_bounds = array<i64: 1, 64>}, {pipeline_mode = #tpu.pipeline_mode<synchronous>, transform_indices = @transform_13, window_bounds = array<i64: 64, 128>}, {pipeline_mode = #tpu.pipeline_mode<synchronous>, transform_indices = @transform_14, window_bounds = array<i64: 1, 128>}, {pipeline_mode = #tpu.pipeline_mode<synchronous>, transform_indices = @transform_15, window_bounds = array<i64: 128, 784>}, {pipeline_mode = #tpu.pipeline_mode<synchronous>, transform_indices = @transform_16, window_bounds = array<i64: 1, 784>}, {transform_indices = @transform_17, window_bounds = array<i64: 16, 128>}, {transform_indices = @transform_18, window_bounds = array<i64: 16, 784>}]} {
    %c0 = arith.constant 0 : index
    %c0_0 = arith.constant 0 : index
    %0 = vector.load %arg1[%c0, %c0_0] : memref<16x784xf32, #tpu.memory_space<vmem>>, vector<16x784xf32>
    %c0_1 = arith.constant 0 : index
    %c0_2 = arith.constant 0 : index
    %1 = vector.load %arg2[%c0_1, %c0_2] : memref<784x128xf32, #tpu.memory_space<vmem>>, vector<784x128xf32>
    %cst = arith.constant dense<0.000000e+00> : vector<16x128xf32>
    %2 = tpu.matmul %0, %1, %cst {dimension_numbers = #tpu.dot_dimension_numbers<[1], [0], [0], [1], [0, 0, 1, 1], [], []>} : vector<16x784xf32>, vector<784x128xf32>, vector<16x128xf32> -> vector<16x128xf32>
    %c0_3 = arith.constant 0 : index
    %c0_4 = arith.constant 0 : index
    %3 = vector.load %arg3[%c0_3, %c0_4] : memref<1x128xf32, #tpu.memory_space<vmem>>, vector<1x128xf32>
    %4 = vector.broadcast %3 : vector<1x128xf32> to vector<16x128xf32>
    %5 = arith.addf %2, %4 : vector<16x128xf32>
    %6 = math.tanh %5 : vector<16x128xf32>
    %c0_5 = arith.constant 0 : index
    %c0_6 = arith.constant 0 : index
    %7 = vector.load %arg4[%c0_5, %c0_6] : memref<128x64xf32, #tpu.memory_space<vmem>>, vector<128x64xf32>
    %cst_7 = arith.constant dense<0.000000e+00> : vector<16x64xf32>
    %8 = tpu.matmul %6, %7, %cst_7 {dimension_numbers = #tpu.dot_dimension_numbers<[1], [0], [0], [1], [0, 0, 1, 1], [], []>} : vector<16x128xf32>, vector<128x64xf32>, vector<16x64xf32> -> vector<16x64xf32>
    %c0_8 = arith.constant 0 : index
    %c0_9 = arith.constant 0 : index
    %9 = vector.load %arg5[%c0_8, %c0_9] : memref<1x64xf32, #tpu.memory_space<vmem>>, vector<1x64xf32>
    %10 = vector.broadcast %9 : vector<1x64xf32> to vector<16x64xf32>
    %11 = arith.addf %8, %10 : vector<16x64xf32>
    %12 = math.tanh %11 : vector<16x64xf32>
    %c0_10 = arith.constant 0 : index
    %c0_11 = arith.constant 0 : index
    %13 = vector.load %arg6[%c0_10, %c0_11] : memref<64x12xf32, #tpu.memory_space<vmem>>, vector<64x12xf32>
    %cst_12 = arith.constant dense<0.000000e+00> : vector<16x12xf32>
    %14 = tpu.matmul %12, %13, %cst_12 {dimension_numbers = #tpu.dot_dimension_numbers<[1], [0], [0], [1], [0, 0, 1, 1], [], []>} : vector<16x64xf32>, vector<64x12xf32>, vector<16x12xf32> -> vector<16x12xf32>
    %c0_13 = arith.constant 0 : index
    %c0_14 = arith.constant 0 : index
    %15 = vector.load %arg7[%c0_13, %c0_14] : memref<1x12xf32, #tpu.memory_space<vmem>>, vector<1x12xf32>
    %16 = vector.broadcast %15 : vector<1x12xf32> to vector<16x12xf32>
    %17 = arith.addf %14, %16 : vector<16x12xf32>
    %18 = math.tanh %17 : vector<16x12xf32>
    %c0_15 = arith.constant 0 : index
    %c0_16 = arith.constant 0 : index
    %19 = vector.load %arg8[%c0_15, %c0_16] : memref<12x128xf32, #tpu.memory_space<vmem>>, vector<12x128xf32>
    %cst_17 = arith.constant dense<0.000000e+00> : vector<16x128xf32>
    %20 = tpu.matmul %18, %19, %cst_17 {dimension_numbers = #tpu.dot_dimension_numbers<[1], [0], [0], [1], [0, 0, 1, 1], [], []>} : vector<16x12xf32>, vector<12x128xf32>, vector<16x128xf32> -> vector<16x128xf32>
    %c0_18 = arith.constant 0 : index
    %c0_19 = arith.constant 0 : index
    %21 = vector.load %arg9[%c0_18, %c0_19] : memref<1x128xf32, #tpu.memory_space<vmem>>, vector<1x128xf32>
    %22 = vector.broadcast %21 : vector<1x128xf32> to vector<16x128xf32>
    %23 = arith.addf %20, %22 : vector<16x128xf32>
    %c0_20 = arith.constant 0 : index
    %c0_21 = arith.constant 0 : index
    %24 = vector.load %arg18[%c0_20, %c0_21] : memref<16x128xf32, #tpu.memory_space<vmem>>, vector<16x128xf32>
    tpu.vector_store %arg18[%c0_20, %c0_21], %23 {strides = array<i32>} : memref<16x128xf32, #tpu.memory_space<vmem>>, vector<16x128xf32>,
    %c0_22 = arith.constant 0 : index
    %c0_23 = arith.constant 0 : index
    %25 = vector.load %arg10[%c0_22, %c0_23] : memref<128x12xf32, #tpu.memory_space<vmem>>, vector<128x12xf32>
    %cst_24 = arith.constant dense<0.000000e+00> : vector<16x12xf32>
    %26 = tpu.matmul %23, %25, %cst_24 {dimension_numbers = #tpu.dot_dimension_numbers<[1], [0], [0], [1], [0, 0, 1, 1], [], []>} : vector<16x128xf32>, vector<128x12xf32>, vector<16x12xf32> -> vector<16x12xf32>
    %c0_25 = arith.constant 0 : index
    %c0_26 = arith.constant 0 : index
    %27 = vector.load %arg11[%c0_25, %c0_26] : memref<1x12xf32, #tpu.memory_space<vmem>>, vector<1x12xf32>
    %28 = vector.broadcast %27 : vector<1x12xf32> to vector<16x12xf32>
    %29 = arith.addf %26, %28 : vector<16x12xf32>
    %30 = math.tanh %29 : vector<16x12xf32>
    %c0_27 = arith.constant 0 : index
    %c0_28 = arith.constant 0 : index
    %31 = vector.load %arg12[%c0_27, %c0_28] : memref<12x64xf32, #tpu.memory_space<vmem>>, vector<12x64xf32>
    %cst_29 = arith.constant dense<0.000000e+00> : vector<16x64xf32>
    %32 = tpu.matmul %30, %31, %cst_29 {dimension_numbers = #tpu.dot_dimension_numbers<[1], [0], [0], [1], [0, 0, 1, 1], [], []>} : vector<16x12xf32>, vector<12x64xf32>, vector<16x64xf32> -> vector<16x64xf32>
    %c0_30 = arith.constant 0 : index
    %c0_31 = arith.constant 0 : index
    %33 = vector.load %arg13[%c0_30, %c0_31] : memref<1x64xf32, #tpu.memory_space<vmem>>, vector<1x64xf32>
    %34 = vector.broadcast %33 : vector<1x64xf32> to vector<16x64xf32>
    %35 = arith.addf %32, %34 : vector<16x64xf32>
    %36 = math.tanh %35 : vector<16x64xf32>
    %c0_32 = arith.constant 0 : index
    %c0_33 = arith.constant 0 : index
    %37 = vector.load %arg14[%c0_32, %c0_33] : memref<64x128xf32, #tpu.memory_space<vmem>>, vector<64x128xf32>
    %cst_34 = arith.constant dense<0.000000e+00> : vector<16x128xf32>
    %38 = tpu.matmul %36, %37, %cst_34 {dimension_numbers = #tpu.dot_dimension_numbers<[1], [0], [0], [1], [0, 0, 1, 1], [], []>} : vector<16x64xf32>, vector<64x128xf32>, vector<16x128xf32> -> vector<16x128xf32>
    %c0_35 = arith.constant 0 : index
    %c0_36 = arith.constant 0 : index
    %39 = vector.load %arg15[%c0_35, %c0_36] : memref<1x128xf32, #tpu.memory_space<vmem>>, vector<1x128xf32>
    %40 = vector.broadcast %39 : vector<1x128xf32> to vector<16x128xf32>
    %41 = arith.addf %38, %40 : vector<16x128xf32>
    %42 = math.tanh %41 : vector<16x128xf32>
    %c0_37 = arith.constant 0 : index
    %c0_38 = arith.constant 0 : index
    %43 = vector.load %arg16[%c0_37, %c0_38] : memref<128x784xf32, #tpu.memory_space<vmem>>, vector<128x784xf32>
    %cst_39 = arith.constant dense<0.000000e+00> : vector<16x784xf32>
    %44 = tpu.matmul %42, %43, %cst_39 {dimension_numbers = #tpu.dot_dimension_numbers<[1], [0], [0], [1], [0, 0, 1, 1], [], []>} : vector<16x128xf32>, vector<128x784xf32>, vector<16x784xf32> -> vector<16x784xf32>
    %c0_40 = arith.constant 0 : index
    %c0_41 = arith.constant 0 : index
    %45 = vector.load %arg17[%c0_40, %c0_41] : memref<1x784xf32, #tpu.memory_space<vmem>>, vector<1x784xf32>
    %46 = vector.broadcast %45 : vector<1x784xf32> to vector<16x784xf32>
    %47 = arith.addf %44, %46 : vector<16x784xf32>
    %c0_42 = arith.constant 0 : index
    %c0_43 = arith.constant 0 : index
    %48 = vector.load %arg19[%c0_42, %c0_43] : memref<16x784xf32, #tpu.memory_space<vmem>>, vector<16x784xf32>
    tpu.vector_store %arg19[%c0_42, %c0_43], %47 {strides = array<i32>} : memref<16x784xf32, #tpu.memory_space<vmem>>, vector<16x784xf32>,
    return
  }
  func.func @transform_0(%arg0: i32) -> (i32, i32) {
    %c0_i32 = arith.constant 0 : i32
    %c0_i32_0 = arith.constant 0 : i32
    return %arg0, %c0_i32 : i32, i32
  }
  func.func @transform_1(%arg0: i32) -> (i32, i32) {
    %c0_i32 = arith.constant 0 : i32
    %c0_i32_0 = arith.constant 0 : i32
    %c0_i32_1 = arith.constant 0 : i32
    return %c0_i32, %c0_i32_0 : i32, i32
  }
  func.func @transform_2(%arg0: i32) -> (i32, i32) {
    %c0_i32 = arith.constant 0 : i32
    %c0_i32_0 = arith.constant 0 : i32
    %c0_i32_1 = arith.constant 0 : i32
    return %c0_i32, %c0_i32_0 : i32, i32
  }
  func.func @transform_3(%arg0: i32) -> (i32, i32) {
    %c0_i32 = arith.constant 0 : i32
    %c0_i32_0 = arith.constant 0 : i32
    %c0_i32_1 = arith.constant 0 : i32
    return %c0_i32, %c0_i32_0 : i32, i32
  }
  func.func @transform_4(%arg0: i32) -> (i32, i32) {
    %c0_i32 = arith.constant 0 : i32
    %c0_i32_0 = arith.constant 0 : i32
    %c0_i32_1 = arith.constant 0 : i32
    return %c0_i32, %c0_i32_0 : i32, i32
  }
  func.func @transform_5(%arg0: i32) -> (i32, i32) {
    %c0_i32 = arith.constant 0 : i32
    %c0_i32_0 = arith.constant 0 : i32
    %c0_i32_1 = arith.constant 0 : i32
    return %c0_i32, %c0_i32_0 : i32, i32
  }
  func.func @transform_6(%arg0: i32) -> (i32, i32) {
    %c0_i32 = arith.constant 0 : i32
    %c0_i32_0 = arith.constant 0 : i32
    %c0_i32_1 = arith.constant 0 : i32
    return %c0_i32, %c0_i32_0 : i32, i32
  }
  func.func @transform_7(%arg0: i32) -> (i32, i32) {
    %c0_i32 = arith.constant 0 : i32
    %c0_i32_0 = arith.constant 0 : i32
    %c0_i32_1 = arith.constant 0 : i32
    return %c0_i32, %c0_i32_0 : i32, i32
  }
  func.func @transform_8(%arg0: i32) -> (i32, i32) {
    %c0_i32 = arith.constant 0 : i32
    %c0_i32_0 = arith.constant 0 : i32
    %c0_i32_1 = arith.constant 0 : i32
    return %c0_i32, %c0_i32_0 : i32, i32
  }
  func.func @transform_9(%arg0: i32) -> (i32, i32) {
    %c0_i32 = arith.constant 0 : i32
    %c0_i32_0 = arith.constant 0 : i32
    %c0_i32_1 = arith.constant 0 : i32
    return %c0_i32, %c0_i32_0 : i32, i32
  }
  func.func @transform_10(%arg0: i32) -> (i32, i32) {
    %c0_i32 = arith.constant 0 : i32
    %c0_i32_0 = arith.constant 0 : i32
    %c0_i32_1 = arith.constant 0 : i32
    return %c0_i32, %c0_i32_0 : i32, i32
  }
  func.func @transform_11(%arg0: i32) -> (i32, i32) {
    %c0_i32 = arith.constant 0 : i32
    %c0_i32_0 = arith.constant 0 : i32
    %c0_i32_1 = arith.constant 0 : i32
    return %c0_i32, %c0_i32_0 : i32, i32
  }
  func.func @transform_12(%arg0: i32) -> (i32, i32) {
    %c0_i32 = arith.constant 0 : i32
    %c0_i32_0 = arith.constant 0 : i32
    %c0_i32_1 = arith.constant 0 : i32
    return %c0_i32, %c0_i32_0 : i32, i32
  }
  func.func @transform_13(%arg0: i32) -> (i32, i32) {
    %c0_i32 = arith.constant 0 : i32
    %c0_i32_0 = arith.constant 0 : i32
    %c0_i32_1 = arith.constant 0 : i32
    return %c0_i32, %c0_i32_0 : i32, i32
  }
  func.func @transform_14(%arg0: i32) -> (i32, i32) {
    %c0_i32 = arith.constant 0 : i32
    %c0_i32_0 = arith.constant 0 : i32
    %c0_i32_1 = arith.constant 0 : i32
    return %c0_i32, %c0_i32_0 : i32, i32
  }
  func.func @transform_15(%arg0: i32) -> (i32, i32) {
    %c0_i32 = arith.constant 0 : i32
    %c0_i32_0 = arith.constant 0 : i32
    %c0_i32_1 = arith.constant 0 : i32
    return %c0_i32, %c0_i32_0 : i32, i32
  }
  func.func @transform_16(%arg0: i32) -> (i32, i32) {
    %c0_i32 = arith.constant 0 : i32
    %c0_i32_0 = arith.constant 0 : i32
    %c0_i32_1 = arith.constant 0 : i32
    return %c0_i32, %c0_i32_0 : i32, i32
  }
  func.func @transform_17(%arg0: i32) -> (i32, i32) {
    %c0_i32 = arith.constant 0 : i32
    %c0_i32_0 = arith.constant 0 : i32
    return %arg0, %c0_i32 : i32, i32
  }
  func.func @transform_18(%arg0: i32) -> (i32, i32) {
    %c0_i32 = arith.constant 0 : i32
    %c0_i32_0 = arith.constant 0 : i32
    return %arg0, %c0_i32 : i32, i32
  }
}

</mosaic_0001>

<llo_original>
// kernel: autoencoder_forward.1
$region0: #{autoencoder_forward.1}
  #allocation0 [shape = 'u32[]', space=smem, size = 0x4, offset = 0x4, fixed_abs, tag = 'smem constant byte address 0x4 - core index']
  #allocation1 [shape = 'u32[144,128]{1,0:T(1,128)}', space=vmem, size = 0x12000, scoped, tag = 'internal scratch']
  %s0 = inlined_call_operand.hbm [shape: f32[16,784], index: 0, kind: input, shape index: {}]
  %s1 = inlined_call_operand.hbm [shape: f32[784,128], index: 1, kind: input, shape index: {}]
  %s2 = inlined_call_operand.vmem [shape: f32[1,128], index: 2, kind: input, shape index: {}]
  %s3 = inlined_call_operand.hbm [shape: f32[128,64], index: 3, kind: input, shape index: {}]
  %s4 = inlined_call_operand.vmem [shape: f32[1,64], index: 4, kind: input, shape index: {}]
  %s5 = inlined_call_operand.hbm [shape: f32[64,12], index: 5, kind: input, shape index: {}]
  %s6 = inlined_call_operand.vmem [shape: f32[1,12], index: 6, kind: input, shape index: {}]
  %s7 = inlined_call_operand.vmem [shape: f32[12,128], index: 7, kind: input, shape index: {}]
  %s8 = inlined_call_operand.vmem [shape: f32[1,128], index: 8, kind: input, shape index: {}]
  %s9 = inlined_call_operand.hbm [shape: f32[128,12], index: 9, kind: input, shape index: {}]
  %s10 = inlined_call_operand.vmem [shape: f32[1,12], index: 10, kind: input, shape index: {}]
  %s11 = inlined_call_operand.hbm [shape: f32[12,64], index: 11, kind: input, shape index: {}]
  %s12 = inlined_call_operand.vmem [shape: f32[1,64], index: 12, kind: input, shape index: {}]
  %s13 = inlined_call_operand.hbm [shape: f32[64,128], index: 13, kind: input, shape index: {}]
  %s14 = inlined_call_operand.vmem [shape: f32[1,128], index: 14, kind: input, shape index: {}]
  %s15 = inlined_call_operand.hbm [shape: f32[128,784], index: 15, kind: input, shape index: {}]
  %s16 = inlined_call_operand.vmem [shape: f32[1,784], index: 16, kind: input, shape index: {}]
  %s17 = inlined_call_operand.vmem [shape: f32[16,128], index: 17, kind: output, shape index: {0}]
  %s18 = inlined_call_operand.hbm [shape: f32[16,784], index: 18, kind: output, shape index: {1}]
  %19 = xla_tuple %s17, %s18
  %s20 = sld [smem:[#allocation0]]
  $region118: #{autoencoder_forward.1} parent=0
    _
  %s22 = ssub.s32 1, %s20
  %s23 = scalar_select 0, %s22, %s20
  $region1: #{autoencoder_forward.1} parent=0
    #allocation2 [shape = 'u8[57344]{0}', space=vmem, size = 0xe000, scoped, tag = 'input window, operand 0, single buffered']
    #allocation3 [shape = 's32[1]{0}', space=sflag, size = 0x4, scoped, tag = 'scoped memory for autoencoder_forward.1']
    #allocation4 [shape = 's32[1]{0}', space=sflag, size = 0x4, scoped, tag = 'scoped memory for autoencoder_forward.1']
    #allocation5 [shape = 'u8[401408]{0}', space=vmem, size = 0x62000, scoped, tag = 'input window, operand 1, single buffered']
    #allocation6 [shape = 's32[1]{0}', space=sflag, size = 0x4, scoped, tag = 'scoped memory for autoencoder_forward.1']
    #allocation7 [shape = 'u8[65536]{0}', space=vmem, size = 0x10000, scoped, tag = 'input window, operand 3, single buffered']
    #allocation8 [shape = 'u8[32768]{0}', space=vmem, size = 0x8000, scoped, tag = 'input window, operand 5, single buffered']
    #allocation9 [shape = 's32[1]{0}', space=sflag, size = 0x4, scoped, tag = 'scoped memory for autoencoder_forward.1']
    #allocation10 [shape = 'u8[65536]{0}', space=vmem, size = 0x10000, scoped, tag = 'input window, operand 9, single buffered']
    #allocation11 [shape = 'u8[8192]{0}', space=vmem, size = 0x2000, scoped, tag = 'input window, operand 11, single buffered']
    #allocation12 [shape = 's32[1]{0}', space=sflag, size = 0x4, scoped, tag = 'scoped memory for autoencoder_forward.1']
    #allocation13 [shape = 'u8[32768]{0}', space=vmem, size = 0x8000, scoped, tag = 'input window, operand 13, single buffered']
    #allocation14 [shape = 'u8[458752]{0}', space=vmem, size = 0x70000, scoped, tag = 'input window, operand 15, single buffered']
    #allocation15 [shape = 's32[1]{0}', space=sflag, size = 0x4, scoped, tag = 'scoped memory for autoencoder_forward.1']
    #allocation16 [shape = 'u8[57344]{0}', space=vmem, size = 0xe000, scoped, tag = 'output window, operand 1, single buffered']
    %24 = vsyncpa [#allocation3], 0
    %25 = vsyncpa [#allocation6], 0
    %26 = vsyncpa [#allocation9], 0
    %27 = vsyncpa [#allocation12], 0
    %28 = vsyncpa [#allocation15], 0
    %29 = vsyncpa [#allocation4], 0
    // Predicated region
    $region2: #{autoencoder_forward.1} parent=1 // pred_check
      _
    $region3: #{autoencoder_forward.1} parent=1 // pred_check_branch
      %31 = sbr.rel (0) target = $region5
    $region4: #{autoencoder_forward.1} parent=1 // pred_region
      %s33 = ssub.s32 1792, 1792
      %34 = vsyncadd [#allocation3], %s33
      %s35 = sshll.u32 [#allocation2], 4
      %s36 = int_to_ptr.vmem [resolvable:$true] %s35
      %41 = dma.hbm_to_vmem [thread:$0]  %s0, 1792, %s36, [#allocation3], 896, 896, 56
    $region5: #{autoencoder_forward.1} parent=1 // pred_fallthru
      _
    // Predicated region
    $region6: #{autoencoder_forward.1} parent=1 // pred_check
      _
    $region7: #{autoencoder_forward.1} parent=1 // pred_check_branch
      %43 = sbr.rel (0) target = $region9
    $region8: #{autoencoder_forward.1} parent=1 // pred_region
      %s45 = ssub.s32 12544, 12544
      %46 = vsyncadd [#allocation6], %s45
      %s47 = sshll.u32 [#allocation5], 4
      %s48 = int_to_ptr.vmem [resolvable:$true] %s47
      %53 = dma.hbm_to_vmem [thread:$0]  %s1, 12544, %s48, [#allocation6], 128, 128, 8
    $region9: #{autoencoder_forward.1} parent=1 // pred_fallthru
      _
    // Predicated region
    $region10: #{autoencoder_forward.1} parent=1 // pred_check
      _
    $region11: #{autoencoder_forward.1} parent=1 // pred_check_branch
      %55 = sbr.rel (0) target = $region13
    $region12: #{autoencoder_forward.1} parent=1 // pred_region
      _
    $region13: #{autoencoder_forward.1} parent=1 // pred_fallthru
      _
    // Predicated region
    $region14: #{autoencoder_forward.1} parent=1 // pred_check
      _
    $region15: #{autoencoder_forward.1} parent=1 // pred_check_branch
      %57 = sbr.rel (0) target = $region17
    $region16: #{autoencoder_forward.1} parent=1 // pred_region
      %s59 = ssub.s32 2048, 2048
      %60 = vsyncadd [#allocation6], %s59
      %s61 = sshll.u32 [#allocation7], 4
      %s62 = int_to_ptr.vmem [resolvable:$true] %s61
      %67 = dma.hbm_to_vmem [thread:$0]  %s3, 2048, %s62, [#allocation6], 128, 128, 8
    $region17: #{autoencoder_forward.1} parent=1 // pred_fallthru
      _
    // Predicated region
    $region18: #{autoencoder_forward.1} parent=1 // pred_check
      _
    $region19: #{autoencoder_forward.1} parent=1 // pred_check_branch
      %69 = sbr.rel (0) target = $region21
    $region20: #{autoencoder_forward.1} parent=1 // pred_region
      _
    $region21: #{autoencoder_forward.1} parent=1 // pred_fallthru
      _
    // Predicated region
    $region22: #{autoencoder_forward.1} parent=1 // pred_check
      _
    $region23: #{autoencoder_forward.1} parent=1 // pred_check_branch
      %71 = sbr.rel (0) target = $region25
    $region24: #{autoencoder_forward.1} parent=1 // pred_region
      %s73 = ssub.s32 1024, 1024
      %74 = vsyncadd [#allocation9], %s73
      %s75 = sshll.u32 [#allocation8], 4
      %s76 = int_to_ptr.vmem [resolvable:$true] %s75
      %81 = dma.hbm_to_vmem [thread:$0]  %s5, 1024, %s76, [#allocation9], 128, 128, 8
    $region25: #{autoencoder_forward.1} parent=1 // pred_fallthru
      _
    // Predicated region
    $region26: #{autoencoder_forward.1} parent=1 // pred_check
      _
    $region27: #{autoencoder_forward.1} parent=1 // pred_check_branch
      %83 = sbr.rel (0) target = $region29
    $region28: #{autoencoder_forward.1} parent=1 // pred_region
      _
    $region29: #{autoencoder_forward.1} parent=1 // pred_fallthru
      _
    // Predicated region
    $region30: #{autoencoder_forward.1} parent=1 // pred_check
      _
    $region31: #{autoencoder_forward.1} parent=1 // pred_check_branch
      %85 = sbr.rel (0) target = $region33
    $region32: #{autoencoder_forward.1} parent=1 // pred_region
      _
    $region33: #{autoencoder_forward.1} parent=1 // pred_fallthru
      _
    // Predicated region
    $region34: #{autoencoder_forward.1} parent=1 // pred_check
      _
    $region35: #{autoencoder_forward.1} parent=1 // pred_check_branch
      %87 = sbr.rel (0) target = $region37
    $region36: #{autoencoder_forward.1} parent=1 // pred_region
      _
    $region37: #{autoencoder_forward.1} parent=1 // pred_fallthru
      _
    // Predicated region
    $region38: #{autoencoder_forward.1} parent=1 // pred_check
      _
    $region39: #{autoencoder_forward.1} parent=1 // pred_check_branch
      %89 = sbr.rel (0) target = $region41
    $region40: #{autoencoder_forward.1} parent=1 // pred_region
      %s91 = ssub.s32 2048, 2048
      %92 = vsyncadd [#allocation9], %s91
      %s93 = sshll.u32 [#allocation10], 4
      %s94 = int_to_ptr.vmem [resolvable:$true] %s93
      %99 = dma.hbm_to_vmem [thread:$0]  %s9, 2048, %s94, [#allocation9], 128, 128, 8
    $region41: #{autoencoder_forward.1} parent=1 // pred_fallthru
      _
    // Predicated region
    $region42: #{autoencoder_forward.1} parent=1 // pred_check
      _
    $region43: #{autoencoder_forward.1} parent=1 // pred_check_branch
      %101 = sbr.rel (0) target = $region45
    $region44: #{autoencoder_forward.1} parent=1 // pred_region
      _
    $region45: #{autoencoder_forward.1} parent=1 // pred_fallthru
      _
    // Predicated region
    $region46: #{autoencoder_forward.1} parent=1 // pred_check
      _
    $region47: #{autoencoder_forward.1} parent=1 // pred_check_branch
      %103 = sbr.rel (0) target = $region49
    $region48: #{autoencoder_forward.1} parent=1 // pred_region
      %s105 = ssub.s32 256, 256
      %106 = vsyncadd [#allocation12], %s105
      %s107 = sshll.u32 [#allocation11], 4
      %s108 = int_to_ptr.vmem [resolvable:$true] %s107
      %113 = dma.hbm_to_vmem [thread:$0]  %s11, 256, %s108, [#allocation12], 128, 128, 8
    $region49: #{autoencoder_forward.1} parent=1 // pred_fallthru
      _
    // Predicated region
    $region50: #{autoencoder_forward.1} parent=1 // pred_check
      _
    $region51: #{autoencoder_forward.1} parent=1 // pred_check_branch
      %115 = sbr.rel (0) target = $region53
    $region52: #{autoencoder_forward.1} parent=1 // pred_region
      _
    $region53: #{autoencoder_forward.1} parent=1 // pred_fallthru
      _
    // Predicated region
    $region54: #{autoencoder_forward.1} parent=1 // pred_check
      _
    $region55: #{autoencoder_forward.1} parent=1 // pred_check_branch
      %117 = sbr.rel (0) target = $region57
    $region56: #{autoencoder_forward.1} parent=1 // pred_region
      %s119 = ssub.s32 1024, 1024
      %120 = vsyncadd [#allocation12], %s119
      %s121 = sshll.u32 [#allocation13], 4
      %s122 = int_to_ptr.vmem [resolvable:$true] %s121
      %127 = dma.hbm_to_vmem [thread:$0]  %s13, 1024, %s122, [#allocation12], 128, 128, 8
    $region57: #{autoencoder_forward.1} parent=1 // pred_fallthru
      _
    // Predicated region
    $region58: #{autoencoder_forward.1} parent=1 // pred_check
      _
    $region59: #{autoencoder_forward.1} parent=1 // pred_check_branch
      %129 = sbr.rel (0) target = $region61
    $region60: #{autoencoder_forward.1} parent=1 // pred_region
      _
    $region61: #{autoencoder_forward.1} parent=1 // pred_fallthru
      _
    // Predicated region
    $region62: #{autoencoder_forward.1} parent=1 // pred_check
      _
    $region63: #{autoencoder_forward.1} parent=1 // pred_check_branch
      %131 = sbr.rel (0) target = $region65
    $region64: #{autoencoder_forward.1} parent=1 // pred_region
      %s133 = ssub.s32 14336, 14336
      %134 = vsyncadd [#allocation15], %s133
      %s135 = sshll.u32 [#allocation14], 4
      %s136 = int_to_ptr.vmem [resolvable:$true] %s135
      %141 = dma.hbm_to_vmem [thread:$0]  %s15, 14336, %s136, [#allocation15], 896, 896, 56
    $region65: #{autoencoder_forward.1} parent=1 // pred_fallthru
      _
    // Predicated region
    $region66: #{autoencoder_forward.1} parent=1 // pred_check
      _
    $region67: #{autoencoder_forward.1} parent=1 // pred_check_branch
      %143 = sbr.rel (0) target = $region69
    $region68: #{autoencoder_forward.1} parent=1 // pred_region
      _
    $region69: #{autoencoder_forward.1} parent=1 // pred_fallthru
      _
    // Predicated region
    $region70: #{autoencoder_forward.1} parent=1 // pred_check
      _
    $region71: #{autoencoder_forward.1} parent=1 // pred_check_branch
      %145 = sbr.rel (0) target = $region73
    $region72: #{autoencoder_forward.1} parent=1 // pred_region
      %146 = dma.done [#allocation3], 1792
    $region73: #{autoencoder_forward.1} parent=1 // pred_fallthru
      _
    // Predicated region
    $region74: #{autoencoder_forward.1} parent=1 // pred_check
      _
    $region75: #{autoencoder_forward.1} parent=1 // pred_check_branch
      %148 = sbr.rel (0) target = $region77
    $region76: #{autoencoder_forward.1} parent=1 // pred_region
      %149 = dma.done [#allocation6], 12544
    $region77: #{autoencoder_forward.1} parent=1 // pred_fallthru
      _
    // Predicated region
    $region78: #{autoencoder_forward.1} parent=1 // pred_check
      _
    $region79: #{autoencoder_forward.1} parent=1 // pred_check_branch
      %151 = sbr.rel (0) target = $region81
    $region80: #{autoencoder_forward.1} parent=1 // pred_region
      %152 = dma.done [#allocation6], 2048
    $region81: #{autoencoder_forward.1} parent=1 // pred_fallthru
      _
    // Predicated region
    $region82: #{autoencoder_forward.1} parent=1 // pred_check
      _
    $region83: #{autoencoder_forward.1} parent=1 // pred_check_branch
      %154 = sbr.rel (0) target = $region85
    $region84: #{autoencoder_forward.1} parent=1 // pred_region
      %155 = dma.done [#allocation9], 1024
    $region85: #{autoencoder_forward.1} parent=1 // pred_fallthru
      _
    // Predicated region
    $region86: #{autoencoder_forward.1} parent=1 // pred_check
      _
    $region87: #{autoencoder_forward.1} parent=1 // pred_check_branch
      %157 = sbr.rel (0) target = $region89
    $region88: #{autoencoder_forward.1} parent=1 // pred_region
      %158 = dma.done [#allocation9], 2048
    $region89: #{autoencoder_forward.1} parent=1 // pred_fallthru
      _
    // Predicated region
    $region90: #{autoencoder_forward.1} parent=1 // pred_check
      _
    $region91: #{autoencoder_forward.1} parent=1 // pred_check_branch
      %160 = sbr.rel (0) target = $region93
    $region92: #{autoencoder_forward.1} parent=1 // pred_region
      %161 = dma.done [#allocation12], 256
    $region93: #{autoencoder_forward.1} parent=1 // pred_fallthru
      _
    // Predicated region
    $region94: #{autoencoder_forward.1} parent=1 // pred_check
      _
    $region95: #{autoencoder_forward.1} parent=1 // pred_check_branch
      %163 = sbr.rel (0) target = $region97
    $region96: #{autoencoder_forward.1} parent=1 // pred_region
      %164 = dma.done [#allocation12], 1024
    $region97: #{autoencoder_forward.1} parent=1 // pred_fallthru
      _
    // Predicated region
    $region98: #{autoencoder_forward.1} parent=1 // pred_check
      _
    $region99: #{autoencoder_forward.1} parent=1 // pred_check_branch
      %166 = sbr.rel (0) target = $region101
    $region100: #{autoencoder_forward.1} parent=1 // pred_region
      %167 = dma.done [#allocation15], 14336
    $region101: #{autoencoder_forward.1} parent=1 // pred_fallthru
      _
    %v168 = vld [vmem:[#allocation2] sm:$0xff]
    %v169 = vld [vmem:[#allocation2 + $0x8] sm:$0xff]
    %v170 = vld [vmem:[#allocation2 + $0x10] sm:$0xff]
    %v171 = vld [vmem:[#allocation2 + $0x18] sm:$0xff]
    %v172 = vld [vmem:[#allocation2 + $0x20] sm:$0xff]
    %v173 = vld [vmem:[#allocation2 + $0x28] sm:$0xff]
    %v174 = vld [vmem:[#allocation2 + $0x30] sm:$0xff]
    %v175 = vld [vmem:[#allocation2 + $0x38] sm:$0xff]
    %v176 = vld [vmem:[#allocation2 + $0x40] sm:$0xff]
    %v177 = vld [vmem:[#allocation2 + $0x48] sm:$0xff]
    %v178 = vld [vmem:[#allocation2 + $0x50] sm:$0xff]
    %v179 = vld [vmem:[#allocation2 + $0x58] sm:$0xff]
    %v180 = vld [vmem:[#allocation2 + $0x60] sm:$0xff]
    %v181 = vld [vmem:[#allocation2 + $0x68] sm:$0xff]
    %v182 = vld [vmem:[#allocation5] sm:$0xff]
    %v183 = vld [vmem:[#allocation5 + $0x8] sm:$0xff]
    %v184 = vld [vmem:[#allocation5 + $0x10] sm:$0xff]
    %v185 = vld [vmem:[#allocation5 + $0x18] sm:$0xff]
    %v186 = vld [vmem:[#allocation5 + $0x20] sm:$0xff]
    %v187 = vld [vmem:[#allocation5 + $0x28] sm:$0xff]
    %v188 = vld [vmem:[#allocation5 + $0x30] sm:$0xff]
    %v189 = vld [vmem:[#allocation5 + $0x38] sm:$0xff]
    %v190 = vld [vmem:[#allocation5 + $0x40] sm:$0xff]
    %v191 = vld [vmem:[#allocation5 + $0x48] sm:$0xff]
    %v192 = vld [vmem:[#allocation5 + $0x50] sm:$0xff]
    %v193 = vld [vmem:[#allocation5 + $0x58] sm:$0xff]
    %v194 = vld [vmem:[#allocation5 + $0x60] sm:$0xff]
    %v195 = vld [vmem:[#allocation5 + $0x68] sm:$0xff]
    %v196 = vld [vmem:[#allocation5 + $0x70] sm:$0xff]
    %v197 = vld [vmem:[#allocation5 + $0x78] sm:$0xff]
    %v198 = vld [vmem:[#allocation5 + $0x80] sm:$0xff]
    %v199 = vld [vmem:[#allocation5 + $0x88] sm:$0xff]
    %v200 = vld [vmem:[#allocation5 + $0x90] sm:$0xff]
    %v201 = vld [vmem:[#allocation5 + $0x98] sm:$0xff]
    %v202 = vld [vmem:[#allocation5 + $0xa0] sm:$0xff]
    %v203 = vld [vmem:[#allocation5 + $0xa8] sm:$0xff]
    %v204 = vld [vmem:[#allocation5 + $0xb0] sm:$0xff]
    %v205 = vld [vmem:[#allocation5 + $0xb8] sm:$0xff]
    %v206 = vld [vmem:[#allocation5 + $0xc0] sm:$0xff]
    %v207 = vld [vmem:[#allocation5 + $0xc8] sm:$0xff]
    %v208 = vld [vmem:[#allocation5 + $0xd0] sm:$0xff]
    %v209 = vld [vmem:[#allocation5 + $0xd8] sm:$0xff]
    %v210 = vld [vmem:[#allocation5 + $0xe0] sm:$0xff]
    %v211 = vld [vmem:[#allocation5 + $0xe8] sm:$0xff]
    %v212 = vld [vmem:[#allocation5 + $0xf0] sm:$0xff]
    %v213 = vld [vmem:[#allocation5 + $0xf8] sm:$0xff]
    %v214 = vld [vmem:[#allocation5 + $0x100] sm:$0xff]
    %v215 = vld [vmem:[#allocation5 + $0x108] sm:$0xff]
    %v216 = vld [vmem:[#allocation5 + $0x110] sm:$0xff]
    %v217 = vld [vmem:[#allocation5 + $0x118] sm:$0xff]
    %v218 = vld [vmem:[#allocation5 + $0x120] sm:$0xff]
    %v219 = vld [vmem:[#allocation5 + $0x128] sm:$0xff]
    %v220 = vld [vmem:[#allocation5 + $0x130] sm:$0xff]
    %v221 = vld [vmem:[#allocation5 + $0x138] sm:$0xff]
    %v222 = vld [vmem:[#allocation5 + $0x140] sm:$0xff]
    %v223 = vld [vmem:[#allocation5 + $0x148] sm:$0xff]
    %v224 = vld [vmem:[#allocation5 + $0x150] sm:$0xff]
    %v225 = vld [vmem:[#allocation5 + $0x158] sm:$0xff]
    %v226 = vld [vmem:[#allocation5 + $0x160] sm:$0xff]
    %v227 = vld [vmem:[#allocation5 + $0x168] sm:$0xff]
    %v228 = vld [vmem:[#allocation5 + $0x170] sm:$0xff]
    %v229 = vld [vmem:[#allocation5 + $0x178] sm:$0xff]
    %v230 = vld [vmem:[#allocation5 + $0x180] sm:$0xff]
    %v231 = vld [vmem:[#allocation5 + $0x188] sm:$0xff]
    %v232 = vld [vmem:[#allocation5 + $0x190] sm:$0xff]
    %v233 = vld [vmem:[#allocation5 + $0x198] sm:$0xff]
    %v234 = vld [vmem:[#allocation5 + $0x1a0] sm:$0xff]
    %v235 = vld [vmem:[#allocation5 + $0x1a8] sm:$0xff]
    %v236 = vld [vmem:[#allocation5 + $0x1b0] sm:$0xff]
    %v237 = vld [vmem:[#allocation5 + $0x1b8] sm:$0xff]
    %v238 = vld [vmem:[#allocation5 + $0x1c0] sm:$0xff]
    %v239 = vld [vmem:[#allocation5 + $0x1c8] sm:$0xff]
    %v240 = vld [vmem:[#allocation5 + $0x1d0] sm:$0xff]
    %v241 = vld [vmem:[#allocation5 + $0x1d8] sm:$0xff]
    %v242 = vld [vmem:[#allocation5 + $0x1e0] sm:$0xff]
    %v243 = vld [vmem:[#allocation5 + $0x1e8] sm:$0xff]
    %v244 = vld [vmem:[#allocation5 + $0x1f0] sm:$0xff]
    %v245 = vld [vmem:[#allocation5 + $0x1f8] sm:$0xff]
    %v246 = vld [vmem:[#allocation5 + $0x200] sm:$0xff]
    %v247 = vld [vmem:[#allocation5 + $0x208] sm:$0xff]
    %v248 = vld [vmem:[#allocation5 + $0x210] sm:$0xff]
    %v249 = vld [vmem:[#allocation5 + $0x218] sm:$0xff]
    %v250 = vld [vmem:[#allocation5 + $0x220] sm:$0xff]
    %v251 = vld [vmem:[#allocation5 + $0x228] sm:$0xff]
    %v252 = vld [vmem:[#allocation5 + $0x230] sm:$0xff]
    %v253 = vld [vmem:[#allocation5 + $0x238] sm:$0xff]
    %v254 = vld [vmem:[#allocation5 + $0x240] sm:$0xff]
    %v255 = vld [vmem:[#allocation5 + $0x248] sm:$0xff]
    %v256 = vld [vmem:[#allocation5 + $0x250] sm:$0xff]
    %v257 = vld [vmem:[#allocation5 + $0x258] sm:$0xff]
    %v258 = vld [vmem:[#allocation5 + $0x260] sm:$0xff]
    %v259 = vld [vmem:[#allocation5 + $0x268] sm:$0xff]
    %v260 = vld [vmem:[#allocation5 + $0x270] sm:$0xff]
    %v261 = vld [vmem:[#allocation5 + $0x278] sm:$0xff]
    %v262 = vld [vmem:[#allocation5 + $0x280] sm:$0xff]
    %v263 = vld [vmem:[#allocation5 + $0x288] sm:$0xff]
    %v264 = vld [vmem:[#allocation5 + $0x290] sm:$0xff]
    %v265 = vld [vmem:[#allocation5 + $0x298] sm:$0xff]
    %v266 = vld [vmem:[#allocation5 + $0x2a0] sm:$0xff]
    %v267 = vld [vmem:[#allocation5 + $0x2a8] sm:$0xff]
    %v268 = vld [vmem:[#allocation5 + $0x2b0] sm:$0xff]
    %v269 = vld [vmem:[#allocation5 + $0x2b8] sm:$0xff]
    %v270 = vld [vmem:[#allocation5 + $0x2c0] sm:$0xff]
    %v271 = vld [vmem:[#allocation5 + $0x2c8] sm:$0xff]
    %v272 = vld [vmem:[#allocation5 + $0x2d0] sm:$0xff]
    %v273 = vld [vmem:[#allocation5 + $0x2d8] sm:$0xff]
    %v274 = vld [vmem:[#allocation5 + $0x2e0] sm:$0xff]
    %v275 = vld [vmem:[#allocation5 + $0x2e8] sm:$0xff]
    %v276 = vld [vmem:[#allocation5 + $0x2f0] sm:$0xff]
    %v277 = vld [vmem:[#allocation5 + $0x2f8] sm:$0xff]
    %v278 = vld [vmem:[#allocation5 + $0x300] sm:$0xff]
    %v279 = vld [vmem:[#allocation5 + $0x308] sm:$0xff]
    %v280 = vld [vmem:[%s2] sm:$0x1]
    %v282 = vlaneseq
    %v283 = vshrl.u32 %v282, 7
    %v284 = vsub.s32 0, %v283
    %v285 = vrot.slane %v280, %v284
    %vm287 = vcmask 130048
    %v289 = vsel %vm287, %v174, 0
    %v292 = vsel %vm287, %v181, 0
    %294 = vmatprep.subr.mxu0 0.0
    %295 = vmatpush1.msra.mxu0 %v182
    %296 = vmatprep.subr.mxu0 0.0
    %297 = vmatpush1.msra.mxu0 %v183
    %298 = vmatprep.subr.mxu0 0.0
    %299 = vmatpush1.msra.mxu0 %v184
    %300 = vmatprep.subr.mxu0 0.0
    %301 = vmatpush1.msra.mxu0 %v185
    %302 = vmatprep.subr.mxu0 0.0
    %303 = vmatpush1.msra.mxu0 %v186
    %304 = vmatprep.subr.mxu0 0.0
    %305 = vmatpush1.msra.mxu0 %v187
    %306 = vmatprep.subr.mxu0 0.0
    %307 = vmatpush1.msra.mxu0 %v188
    %308 = vmatprep.subr.mxu0 0.0
    %309 = vmatpush1.msra.mxu0 %v189
    %310 = vmatprep.subr.mxu0 0.0
    %311 = vmatpush1.msra.mxu0 %v190
    %312 = vmatprep.subr.mxu0 0.0
    %313 = vmatpush1.msra.mxu0 %v191
    %314 = vmatprep.subr.mxu0 0.0
    %315 = vmatpush1.msra.mxu0 %v192
    %316 = vmatprep.subr.mxu0 0.0
    %317 = vmatpush1.msra.mxu0 %v193
    %318 = vmatprep.subr.mxu0 0.0
    %319 = vmatpush1.msra.mxu0 %v194
    %320 = vmatprep.subr.mxu0 0.0
    %321 = vmatpush1.msra.mxu0 %v195
    %322 = vmatprep.subr.mxu0 0.0
    %323 = vmatpush1.msra.mxu0 %v196
    %324 = vmatprep.subr.mxu0 0.0
    %325 = vmatpush1.msra.mxu0 %v197
    %326 = vmatprep.subr.mxu0 0.0
    %327 = vmatpush1.msra.mxu0 %v198
    %328 = vmatprep.subr.mxu0 0.0
    %329 = vmatpush1.msra.mxu0 %v199
    %330 = vmatprep.subr.mxu0 0.0
    %331 = vmatpush1.msra.mxu0 %v200
    %332 = vmatprep.subr.mxu0 0.0
    %333 = vmatpush1.msra.mxu0 %v201
    %334 = vmatprep.subr.mxu0 0.0
    %335 = vmatpush1.msra.mxu0 %v202
    %336 = vmatprep.subr.mxu0 0.0
    %337 = vmatpush1.msra.mxu0 %v203
    %338 = vmatprep.subr.mxu0 0.0
    %339 = vmatpush1.msra.mxu0 %v204
    %340 = vmatprep.subr.mxu0 0.0
    %341 = vmatpush1.msra.mxu0 %v205
    %342 = vmatprep.subr.mxu0 0.0
    %343 = vmatpush1.msra.mxu0 %v206
    %344 = vmatprep.subr.mxu0 0.0
    %345 = vmatpush1.msra.mxu0 %v207
    %346 = vmatprep.subr.mxu0 0.0
    %347 = vmatpush1.msra.mxu0 %v208
    %348 = vmatprep.subr.mxu0 0.0
    %349 = vmatpush1.msra.mxu0 %v209
    %350 = vmatprep.subr.mxu0 0.0
    %351 = vmatpush1.msra.mxu0 %v210
    %352 = vmatprep.subr.mxu0 0.0
    %353 = vmatpush1.msra.mxu0 %v211
    %354 = vmatprep.subr.mxu0 0.0
    %355 = vmatpush1.msra.mxu0 %v212
    %356 = vmatprep.subr.mxu0 0.0
    %357 = vmatpush1.msra.mxu0 %v213
    %358 = vmatprep.mubr.f32.mxu0 %v169
    %359 = vmatmul.mubr.f32.gmra.mrb[0].mxu0 %v168
    %v360 = vpop.f32.mrb[0].mxu0
    %v361 = vadd.f32 %v285, %v360
    %v362 = vpop.f32.mrb[0].mxu0
    %363 = vmatprep.mubr.f32.mxu0 %v176
    %364 = vmatmul.mubr.f32.gmra.mrb[0].mxu0 %v175
    %v365 = vpop.f32.mrb[0].mxu0
    %v366 = vadd.f32 %v285, %v365
    %v367 = vpop.f32.mrb[0].mxu0
    %368 = vdwg.mxu0
    %369 = vmatprep.subr.mxu0 0.0
    %370 = vmatpush1.msra.mxu0 %v214
    %371 = vmatprep.subr.mxu0 0.0
    %372 = vmatpush1.msra.mxu0 %v215
    %373 = vmatprep.subr.mxu0 0.0
    %374 = vmatpush1.msra.mxu0 %v216
    %375 = vmatprep.subr.mxu0 0.0
    %376 = vmatpush1.msra.mxu0 %v217
    %377 = vmatprep.subr.mxu0 0.0
    %378 = vmatpush1.msra.mxu0 %v218
    %379 = vmatprep.subr.mxu0 0.0
    %380 = vmatpush1.msra.mxu0 %v219
    %381 = vmatprep.subr.mxu0 0.0
    %382 = vmatpush1.msra.mxu0 %v220
    %383 = vmatprep.subr.mxu0 0.0
    %384 = vmatpush1.msra.mxu0 %v221
    %385 = vmatprep.subr.mxu0 0.0
    %386 = vmatpush1.msra.mxu0 %v222
    %387 = vmatprep.subr.mxu0 0.0
    %388 = vmatpush1.msra.mxu0 %v223
    %389 = vmatprep.subr.mxu0 0.0
    %390 = vmatpush1.msra.mxu0 %v224
    %391 = vmatprep.subr.mxu0 0.0
    %392 = vmatpush1.msra.mxu0 %v225
    %393 = vmatprep.subr.mxu0 0.0
    %394 = vmatpush1.msra.mxu0 %v226
    %395 = vmatprep.subr.mxu0 0.0
    %396 = vmatpush1.msra.mxu0 %v227
    %397 = vmatprep.subr.mxu0 0.0
    %398 = vmatpush1.msra.mxu0 %v228
    %399 = vmatprep.subr.mxu0 0.0
    %400 = vmatpush1.msra.mxu0 %v229
    %401 = vmatprep.subr.mxu0 0.0
    %402 = vmatpush1.msra.mxu0 %v230
    %403 = vmatprep.subr.mxu0 0.0
    %404 = vmatpush1.msra.mxu0 %v231
    %405 = vmatprep.subr.mxu0 0.0
    %406 = vmatpush1.msra.mxu0 %v232
    %407 = vmatprep.subr.mxu0 0.0
    %408 = vmatpush1.msra.mxu0 %v233
    %409 = vmatprep.subr.mxu0 0.0
    %410 = vmatpush1.msra.mxu0 %v234
    %411 = vmatprep.subr.mxu0 0.0
    %412 = vmatpush1.msra.mxu0 %v235
    %413 = vmatprep.subr.mxu0 0.0
    %414 = vmatpush1.msra.mxu0 %v236
    %415 = vmatprep.subr.mxu0 0.0
    %416 = vmatpush1.msra.mxu0 %v237
    %417 = vmatprep.subr.mxu0 0.0
    %418 = vmatpush1.msra.mxu0 %v238
    %419 = vmatprep.subr.mxu0 0.0
    %420 = vmatpush1.msra.mxu0 %v239
    %421 = vmatprep.subr.mxu0 0.0
    %422 = vmatpush1.msra.mxu0 %v240
    %423 = vmatprep.subr.mxu0 0.0
    %424 = vmatpush1.msra.mxu0 %v241
    %425 = vmatprep.subr.mxu0 0.0
    %426 = vmatpush1.msra.mxu0 %v242
    %427 = vmatprep.subr.mxu0 0.0
    %428 = vmatpush1.msra.mxu0 %v243
    %429 = vmatprep.subr.mxu0 0.0
    %430 = vmatpush1.msra.mxu0 %v244
    %431 = vmatprep.subr.mxu0 0.0
    %432 = vmatpush1.msra.mxu0 %v245
    %433 = vmatprep.mubr.f32.mxu0 %v171
    %434 = vmatmul.mubr.f32.gmra.mrb[0].mxu0 %v170
    %v435 = vpop.f32.mrb[0].mxu0
    %v436 = vadd.f32 %v361, %v435
    %v437 = vpop.f32.mrb[0].mxu0
    %438 = vmatprep.mubr.f32.mxu0 %v178
    %439 = vmatmul.mubr.f32.gmra.mrb[0].mxu0 %v177
    %v440 = vpop.f32.mrb[0].mxu0
    %v441 = vadd.f32 %v366, %v440
    %v442 = vpop.f32.mrb[0].mxu0
    %443 = vdwg.mxu0
    %444 = vmatprep.subr.mxu0 0.0
    %445 = vmatpush1.msra.mxu0 %v246
    %446 = vmatprep.subr.mxu0 0.0
    %447 = vmatpush1.msra.mxu0 %v247
    %448 = vmatprep.subr.mxu0 0.0
    %449 = vmatpush1.msra.mxu0 %v248
    %450 = vmatprep.subr.mxu0 0.0
    %451 = vmatpush1.msra.mxu0 %v249
    %452 = vmatprep.subr.mxu0 0.0
    %453 = vmatpush1.msra.mxu0 %v250
    %454 = vmatprep.subr.mxu0 0.0
    %455 = vmatpush1.msra.mxu0 %v251
    %456 = vmatprep.subr.mxu0 0.0
    %457 = vmatpush1.msra.mxu0 %v252
    %458 = vmatprep.subr.mxu0 0.0
    %459 = vmatpush1.msra.mxu0 %v253
    %460 = vmatprep.subr.mxu0 0.0
    %461 = vmatpush1.msra.mxu0 %v254
    %462 = vmatprep.subr.mxu0 0.0
    %463 = vmatpush1.msra.mxu0 %v255
    %464 = vmatprep.subr.mxu0 0.0
    %465 = vmatpush1.msra.mxu0 %v256
    %466 = vmatprep.subr.mxu0 0.0
    %467 = vmatpush1.msra.mxu0 %v257
    %468 = vmatprep.subr.mxu0 0.0
    %469 = vmatpush1.msra.mxu0 %v258
    %470 = vmatprep.subr.mxu0 0.0
    %471 = vmatpush1.msra.mxu0 %v259
    %472 = vmatprep.subr.mxu0 0.0
    %473 = vmatpush1.msra.mxu0 %v260
    %474 = vmatprep.subr.mxu0 0.0
    %475 = vmatpush1.msra.mxu0 %v261
    %476 = vmatprep.subr.mxu0 0.0
    %477 = vmatpush1.msra.mxu0 %v262
    %478 = vmatprep.subr.mxu0 0.0
    %479 = vmatpush1.msra.mxu0 %v263
    %480 = vmatprep.subr.mxu0 0.0
    %481 = vmatpush1.msra.mxu0 %v264
    %482 = vmatprep.subr.mxu0 0.0
    %483 = vmatpush1.msra.mxu0 %v265
    %484 = vmatprep.subr.mxu0 0.0
    %485 = vmatpush1.msra.mxu0 %v266
    %486 = vmatprep.subr.mxu0 0.0
    %487 = vmatpush1.msra.mxu0 %v267
    %488 = vmatprep.subr.mxu0 0.0
    %489 = vmatpush1.msra.mxu0 %v268
    %490 = vmatprep.subr.mxu0 0.0
    %491 = vmatpush1.msra.mxu0 %v269
    %492 = vmatprep.subr.mxu0 0.0
    %493 = vmatpush1.msra.mxu0 %v270
    %494 = vmatprep.subr.mxu0 0.0
    %495 = vmatpush1.msra.mxu0 %v271
    %496 = vmatprep.subr.mxu0 0.0
    %497 = vmatpush1.msra.mxu0 %v272
    %498 = vmatprep.subr.mxu0 0.0
    %499 = vmatpush1.msra.mxu0 %v273
    %500 = vmatprep.subr.mxu0 0.0
    %501 = vmatpush1.msra.mxu0 %v274
    %502 = vmatprep.subr.mxu0 0.0
    %503 = vmatpush1.msra.mxu0 %v275
    %504 = vmatprep.subr.mxu0 0.0
    %505 = vmatpush1.msra.mxu0 %v276
    %506 = vmatprep.subr.mxu0 0.0
    %507 = vmatpush1.msra.mxu0 %v277
    %508 = vmatprep.mubr.f32.mxu0 %v173
    %509 = vmatmul.mubr.f32.gmra.mrb[0].mxu0 %v172
    %v510 = vpop.f32.mrb[0].mxu0
    %v511 = vadd.f32 %v436, %v510
    %v512 = vpop.f32.mrb[0].mxu0
    %513 = vmatprep.mubr.f32.mxu0 %v180
    %514 = vmatmul.mubr.f32.gmra.mrb[0].mxu0 %v179
    %v515 = vpop.f32.mrb[0].mxu0
    %v516 = vadd.f32 %v441, %v515
    %v517 = vpop.f32.mrb[0].mxu0
    %518 = vdwg.mxu0
    %519 = vmatprep.subr.mxu0 0.0
    %520 = vmatpush1.msra.mxu0 %v278
    %521 = vmatprep.subr.mxu0 0.0
    %522 = vmatpush1.msra.mxu0 %v279
    %523 = vmatprep.subr.mxu0 0.0
    %524 = vmatpush1.msra.mxu0 0.0
    %525 = vmatprep.subr.mxu0 0.0
    %526 = vmatpush1.msra.mxu0 0.0
    %527 = vmatprep.subr.mxu0 0.0
    %528 = vmatpush1.msra.mxu0 0.0
    %529 = vmatprep.subr.mxu0 0.0
    %530 = vmatpush1.msra.mxu0 0.0
    %531 = vmatprep.subr.mxu0 0.0
    %532 = vmatpush1.msra.mxu0 0.0
    %533 = vmatprep.subr.mxu0 0.0
    %534 = vmatpush1.msra.mxu0 0.0
    %535 = vmatprep.subr.mxu0 0.0
    %536 = vmatpush1.msra.mxu0 0.0
    %537 = vmatprep.subr.mxu0 0.0
    %538 = vmatpush1.msra.mxu0 0.0
    %539 = vmatprep.subr.mxu0 0.0
    %540 = vmatpush1.msra.mxu0 0.0
    %541 = vmatprep.subr.mxu0 0.0
    %542 = vmatpush1.msra.mxu0 0.0
    %543 = vmatprep.subr.mxu0 0.0
    %544 = vmatpush1.msra.mxu0 0.0
    %545 = vmatprep.subr.mxu0 0.0
    %546 = vmatpush1.msra.mxu0 0.0
    %547 = vmatprep.subr.mxu0 0.0
    %548 = vmatpush1.msra.mxu0 0.0
    %549 = vmatprep.subr.mxu0 0.0
    %550 = vmatpush1.msra.mxu0 0.0
    %551 = vmatprep.subr.mxu0 0.0
    %552 = vmatpush1.msra.mxu0 0.0
    %553 = vmatprep.subr.mxu0 0.0
    %554 = vmatpush1.msra.mxu0 0.0
    %555 = vmatprep.subr.mxu0 0.0
    %556 = vmatpush1.msra.mxu0 0.0
    %557 = vmatprep.subr.mxu0 0.0
    %558 = vmatpush1.msra.mxu0 0.0
    %559 = vmatprep.subr.mxu0 0.0
    %560 = vmatpush1.msra.mxu0 0.0
    %561 = vmatprep.subr.mxu0 0.0
    %562 = vmatpush1.msra.mxu0 0.0
    %563 = vmatprep.subr.mxu0 0.0
    %564 = vmatpush1.msra.mxu0 0.0
    %565 = vmatprep.subr.mxu0 0.0
    %566 = vmatpush1.msra.mxu0 0.0
    %567 = vmatprep.subr.mxu0 0.0
    %568 = vmatpush1.msra.mxu0 0.0
    %569 = vmatprep.subr.mxu0 0.0
    %570 = vmatpush1.msra.mxu0 0.0
    %571 = vmatprep.subr.mxu0 0.0
    %572 = vmatpush1.msra.mxu0 0.0
    %573 = vmatprep.subr.mxu0 0.0
    %574 = vmatpush1.msra.mxu0 0.0
    %575 = vmatprep.subr.mxu0 0.0
    %576 = vmatpush1.msra.mxu0 0.0
    %577 = vmatprep.subr.mxu0 0.0
    %578 = vmatpush1.msra.mxu0 0.0
    %579 = vmatprep.subr.mxu0 0.0
    %580 = vmatpush1.msra.mxu0 0.0
    %581 = vmatprep.subr.mxu0 0.0
    %582 = vmatpush1.msra.mxu0 0.0
    %583 = vmatprep.mubr.f32.mxu0 0.0
    %584 = vmatmul.mubr.f32.gmra.mrb[0].mxu0 %v289
    %v585 = vpop.f32.mrb[0].mxu0
    %v586 = vadd.f32 %v511, %v585
    %v587 = vpop.f32.mrb[0].mxu0
    %588 = vmatprep.mubr.f32.mxu0 0.0
    %589 = vmatmul.mubr.f32.gmra.mrb[0].mxu0 %v292
    %v590 = vpop.f32.mrb[0].mxu0
    %v591 = vadd.f32 %v516, %v590
    %v592 = vpop.f32.mrb[0].mxu0
    %593 = vdwg.mxu0
    %v594 = vtanh.pop %v586
    %v595 = vtanh.pop %v591
    %v596 = vld [vmem:[#allocation7] sm:$0xff]
    %v597 = vld [vmem:[#allocation7 + $0x8] sm:$0xff]
    %v598 = vld [vmem:[#allocation7 + $0x10] sm:$0xff]
    %v599 = vld [vmem:[#allocation7 + $0x18] sm:$0xff]
    %v600 = vld [vmem:[#allocation7 + $0x20] sm:$0xff]
    %v601 = vld [vmem:[#allocation7 + $0x28] sm:$0xff]
    %v602 = vld [vmem:[#allocation7 + $0x30] sm:$0xff]
    %v603 = vld [vmem:[#allocation7 + $0x38] sm:$0xff]
    %v604 = vld [vmem:[#allocation7 + $0x40] sm:$0xff]
    %v605 = vld [vmem:[#allocation7 + $0x48] sm:$0xff]
    %v606 = vld [vmem:[#allocation7 + $0x50] sm:$0xff]
    %v607 = vld [vmem:[#allocation7 + $0x58] sm:$0xff]
    %v608 = vld [vmem:[#allocation7 + $0x60] sm:$0xff]
    %v609 = vld [vmem:[#allocation7 + $0x68] sm:$0xff]
    %v610 = vld [vmem:[#allocation7 + $0x70] sm:$0xff]
    %v611 = vld [vmem:[#allocation7 + $0x78] sm:$0xff]
    %v612 = vld [vmem:[%s4] sm:$0x1]
    %v614 = vlaneseq
    %v615 = vshrl.u32 %v614, 7
    %v616 = vsub.s32 0, %v615
    %v617 = vrot.slane %v612, %v616
    %619 = vmatprep.subr.mxu0 0.0
    %620 = vmatpush1.msra.mxu0 %v596
    %621 = vmatprep.subr.mxu0 0.0
    %622 = vmatpush1.msra.mxu0 %v597
    %623 = vmatprep.subr.mxu0 0.0
    %624 = vmatpush1.msra.mxu0 %v598
    %625 = vmatprep.subr.mxu0 0.0
    %626 = vmatpush1.msra.mxu0 %v599
    %627 = vmatprep.subr.mxu0 0.0
    %628 = vmatpush1.msra.mxu0 %v600
    %629 = vmatprep.subr.mxu0 0.0
    %630 = vmatpush1.msra.mxu0 %v601
    %631 = vmatprep.subr.mxu0 0.0
    %632 = vmatpush1.msra.mxu0 %v602
    %633 = vmatprep.subr.mxu0 0.0
    %634 = vmatpush1.msra.mxu0 %v603
    %635 = vmatprep.subr.mxu0 0.0
    %636 = vmatpush1.msra.mxu0 %v604
    %637 = vmatprep.subr.mxu0 0.0
    %638 = vmatpush1.msra.mxu0 %v605
    %639 = vmatprep.subr.mxu0 0.0
    %640 = vmatpush1.msra.mxu0 %v606
    %641 = vmatprep.subr.mxu0 0.0
    %642 = vmatpush1.msra.mxu0 %v607
    %643 = vmatprep.subr.mxu0 0.0
    %644 = vmatpush1.msra.mxu0 %v608
    %645 = vmatprep.subr.mxu0 0.0
    %646 = vmatpush1.msra.mxu0 %v609
    %647 = vmatprep.subr.mxu0 0.0
    %648 = vmatpush1.msra.mxu0 %v610
    %649 = vmatprep.subr.mxu0 0.0
    %650 = vmatpush1.msra.mxu0 %v611
    %651 = vmatprep.subr.mxu0 0.0
    %652 = vmatpush1.msra.mxu0 0.0
    %653 = vmatprep.subr.mxu0 0.0
    %654 = vmatpush1.msra.mxu0 0.0
    %655 = vmatprep.subr.mxu0 0.0
    %656 = vmatpush1.msra.mxu0 0.0
    %657 = vmatprep.subr.mxu0 0.0
    %658 = vmatpush1.msra.mxu0 0.0
    %659 = vmatprep.subr.mxu0 0.0
    %660 = vmatpush1.msra.mxu0 0.0
    %661 = vmatprep.subr.mxu0 0.0
    %662 = vmatpush1.msra.mxu0 0.0
    %663 = vmatprep.subr.mxu0 0.0
    %664 = vmatpush1.msra.mxu0 0.0
    %665 = vmatprep.subr.mxu0 0.0
    %666 = vmatpush1.msra.mxu0 0.0
    %667 = vmatprep.subr.mxu0 0.0
    %668 = vmatpush1.msra.mxu0 0.0
    %669 = vmatprep.subr.mxu0 0.0
    %670 = vmatpush1.msra.mxu0 0.0
    %671 = vmatprep.subr.mxu0 0.0
    %672 = vmatpush1.msra.mxu0 0.0
    %673 = vmatprep.subr.mxu0 0.0
    %674 = vmatpush1.msra.mxu0 0.0
    %675 = vmatprep.subr.mxu0 0.0
    %676 = vmatpush1.msra.mxu0 0.0
    %677 = vmatprep.subr.mxu0 0.0
    %678 = vmatpush1.msra.mxu0 0.0
    %679 = vmatprep.subr.mxu0 0.0
    %680 = vmatpush1.msra.mxu0 0.0
    %681 = vmatprep.subr.mxu0 0.0
    %682 = vmatpush1.msra.mxu0 0.0
    %683 = vmatprep.mubr.f32.mxu0 0.0
    %684 = vmatmul.mubr.f32.gmra.mrb[0].mxu0 %v594
    %v685 = vpop.f32.mrb[0].mxu0
    %v686 = vadd.f32 %v617, %v685
    %v687 = vpop.f32.mrb[0].mxu0
    %688 = vmatprep.mubr.f32.mxu0 0.0
    %689 = vmatmul.mubr.f32.gmra.mrb[0].mxu0 %v595
    %v690 = vpop.f32.mrb[0].mxu0
    %v691 = vadd.f32 %v617, %v690
    %v692 = vpop.f32.mrb[0].mxu0
    %693 = vdwg.mxu0
    %v694 = vtanh.pop %v686
    %v695 = vtanh.pop %v691
    %v696 = vld [vmem:[#allocation8] sm:$0xff]
    %v697 = vld [vmem:[#allocation8 + $0x8] sm:$0xff]
    %v698 = vld [vmem:[#allocation8 + $0x10] sm:$0xff]
    %v699 = vld [vmem:[#allocation8 + $0x18] sm:$0xff]
    %v700 = vld [vmem:[#allocation8 + $0x20] sm:$0xff]
    %v701 = vld [vmem:[#allocation8 + $0x28] sm:$0xff]
    %v702 = vld [vmem:[#allocation8 + $0x30] sm:$0xff]
    %v703 = vld [vmem:[#allocation8 + $0x38] sm:$0xff]
    %v704 = vld [vmem:[%s6] sm:$0x1]
    %v706 = vlaneseq
    %v707 = vshrl.u32 %v706, 7
    %v708 = vsub.s32 0, %v707
    %v709 = vrot.slane %v704, %v708
    %vm711 = vcmask 523264
    %v713 = vsel %vm711, %v694, 0
    %v716 = vsel %vm711, %v695, 0
    %718 = vmatprep.subr.mxu0 0.0
    %719 = vmatpush1.msra.mxu0 %v696
    %720 = vmatprep.subr.mxu0 0.0
    %721 = vmatpush1.msra.mxu0 %v697
    %722 = vmatprep.subr.mxu0 0.0
    %723 = vmatpush1.msra.mxu0 %v698
    %724 = vmatprep.subr.mxu0 0.0
    %725 = vmatpush1.msra.mxu0 %v699
    %726 = vmatprep.subr.mxu0 0.0
    %727 = vmatpush1.msra.mxu0 %v700
    %728 = vmatprep.subr.mxu0 0.0
    %729 = vmatpush1.msra.mxu0 %v701
    %730 = vmatprep.subr.mxu0 0.0
    %731 = vmatpush1.msra.mxu0 %v702
    %732 = vmatprep.subr.mxu0 0.0
    %733 = vmatpush1.msra.mxu0 %v703
    %734 = vmatprep.subr.mxu0 0.0
    %735 = vmatpush1.msra.mxu0 0.0
    %736 = vmatprep.subr.mxu0 0.0
    %737 = vmatpush1.msra.mxu0 0.0
    %738 = vmatprep.subr.mxu0 0.0
    %739 = vmatpush1.msra.mxu0 0.0
    %740 = vmatprep.subr.mxu0 0.0
    %741 = vmatpush1.msra.mxu0 0.0
    %742 = vmatprep.subr.mxu0 0.0
    %743 = vmatpush1.msra.mxu0 0.0
    %744 = vmatprep.subr.mxu0 0.0
    %745 = vmatpush1.msra.mxu0 0.0
    %746 = vmatprep.subr.mxu0 0.0
    %747 = vmatpush1.msra.mxu0 0.0
    %748 = vmatprep.subr.mxu0 0.0
    %749 = vmatpush1.msra.mxu0 0.0
    %750 = vmatprep.subr.mxu0 0.0
    %751 = vmatpush1.msra.mxu0 0.0
    %752 = vmatprep.subr.mxu0 0.0
    %753 = vmatpush1.msra.mxu0 0.0
    %754 = vmatprep.subr.mxu0 0.0
    %755 = vmatpush1.msra.mxu0 0.0
    %756 = vmatprep.subr.mxu0 0.0
    %757 = vmatpush1.msra.mxu0 0.0
    %758 = vmatprep.subr.mxu0 0.0
    %759 = vmatpush1.msra.mxu0 0.0
    %760 = vmatprep.subr.mxu0 0.0
    %761 = vmatpush1.msra.mxu0 0.0
    %762 = vmatprep.subr.mxu0 0.0
    %763 = vmatpush1.msra.mxu0 0.0
    %764 = vmatprep.subr.mxu0 0.0
    %765 = vmatpush1.msra.mxu0 0.0
    %766 = vmatprep.subr.mxu0 0.0
    %767 = vmatpush1.msra.mxu0 0.0
    %768 = vmatprep.subr.mxu0 0.0
    %769 = vmatpush1.msra.mxu0 0.0
    %770 = vmatprep.subr.mxu0 0.0
    %771 = vmatpush1.msra.mxu0 0.0
    %772 = vmatprep.subr.mxu0 0.0
    %773 = vmatpush1.msra.mxu0 0.0
    %774 = vmatprep.subr.mxu0 0.0
    %775 = vmatpush1.msra.mxu0 0.0
    %776 = vmatprep.subr.mxu0 0.0
    %777 = vmatpush1.msra.mxu0 0.0
    %778 = vmatprep.subr.mxu0 0.0
    %779 = vmatpush1.msra.mxu0 0.0
    %780 = vmatprep.subr.mxu0 0.0
    %781 = vmatpush1.msra.mxu0 0.0
    %782 = vmatprep.mubr.f32.mxu0 0.0
    %783 = vmatmul.mubr.f32.gmra.mrb[0].mxu0 %v713
    %v784 = vpop.f32.mrb[0].mxu0
    %v785 = vadd.f32 %v709, %v784
    %v786 = vpop.f32.mrb[0].mxu0
    %787 = vmatprep.mubr.f32.mxu0 0.0
    %788 = vmatmul.mubr.f32.gmra.mrb[0].mxu0 %v716
    %v789 = vpop.f32.mrb[0].mxu0
    %v790 = vadd.f32 %v709, %v789
    %v791 = vpop.f32.mrb[0].mxu0
    %792 = vdwg.mxu0
    %v793 = vtanh.pop %v785
    %v794 = vtanh.pop %v790
    %v795 = vld [vmem:[%s7] sm:$0xff]
    %v796 = vld [vmem:[%s7 + $0x8] sm:$0xf]
    %v797 = vld [vmem:[%s8] sm:$0x1]
    %v799 = vlaneseq
    %v800 = vshrl.u32 %v799, 7
    %v801 = vsub.s32 0, %v800
    %v802 = vrot.slane %v797, %v801
    %vm804 = vcmask 97280
    %v806 = vsel %vm804, %v793, 0
    %v809 = vsel %vm804, %v794, 0
    %vm811 = vcmask 1043456
    %v813 = vsel %vm811, %v796, 0
    %815 = vmatprep.subr.mxu0 0.0
    %816 = vmatpush1.msra.mxu0 %v795
    %817 = vmatprep.subr.mxu0 0.0
    %818 = vmatpush1.msra.mxu0 %v813
    %819 = vmatprep.subr.mxu0 0.0
    %820 = vmatpush1.msra.mxu0 0.0
    %821 = vmatprep.subr.mxu0 0.0
    %822 = vmatpush1.msra.mxu0 0.0
    %823 = vmatprep.subr.mxu0 0.0
    %824 = vmatpush1.msra.mxu0 0.0
    %825 = vmatprep.subr.mxu0 0.0
    %826 = vmatpush1.msra.mxu0 0.0
    %827 = vmatprep.subr.mxu0 0.0
    %828 = vmatpush1.msra.mxu0 0.0
    %829 = vmatprep.subr.mxu0 0.0
    %830 = vmatpush1.msra.mxu0 0.0
    %831 = vmatprep.subr.mxu0 0.0
    %832 = vmatpush1.msra.mxu0 0.0
    %833 = vmatprep.subr.mxu0 0.0
    %834 = vmatpush1.msra.mxu0 0.0
    %835 = vmatprep.subr.mxu0 0.0
    %836 = vmatpush1.msra.mxu0 0.0
    %837 = vmatprep.subr.mxu0 0.0
    %838 = vmatpush1.msra.mxu0 0.0
    %839 = vmatprep.subr.mxu0 0.0
    %840 = vmatpush1.msra.mxu0 0.0
    %841 = vmatprep.subr.mxu0 0.0
    %842 = vmatpush1.msra.mxu0 0.0
    %843 = vmatprep.subr.mxu0 0.0
    %844 = vmatpush1.msra.mxu0 0.0
    %845 = vmatprep.subr.mxu0 0.0
    %846 = vmatpush1.msra.mxu0 0.0
    %847 = vmatprep.subr.mxu0 0.0
    %848 = vmatpush1.msra.mxu0 0.0
    %849 = vmatprep.subr.mxu0 0.0
    %850 = vmatpush1.msra.mxu0 0.0
    %851 = vmatprep.subr.mxu0 0.0
    %852 = vmatpush1.msra.mxu0 0.0
    %853 = vmatprep.subr.mxu0 0.0
    %854 = vmatpush1.msra.mxu0 0.0
    %855 = vmatprep.subr.mxu0 0.0
    %856 = vmatpush1.msra.mxu0 0.0
    %857 = vmatprep.subr.mxu0 0.0
    %858 = vmatpush1.msra.mxu0 0.0
    %859 = vmatprep.subr.mxu0 0.0
    %860 = vmatpush1.msra.mxu0 0.0
    %861 = vmatprep.subr.mxu0 0.0
    %862 = vmatpush1.msra.mxu0 0.0
    %863 = vmatprep.subr.mxu0 0.0
    %864 = vmatpush1.msra.mxu0 0.0
    %865 = vmatprep.subr.mxu0 0.0
    %866 = vmatpush1.msra.mxu0 0.0
    %867 = vmatprep.subr.mxu0 0.0
    %868 = vmatpush1.msra.mxu0 0.0
    %869 = vmatprep.subr.mxu0 0.0
    %870 = vmatpush1.msra.mxu0 0.0
    %871 = vmatprep.subr.mxu0 0.0
    %872 = vmatpush1.msra.mxu0 0.0
    %873 = vmatprep.subr.mxu0 0.0
    %874 = vmatpush1.msra.mxu0 0.0
    %875 = vmatprep.subr.mxu0 0.0
    %876 = vmatpush1.msra.mxu0 0.0
    %877 = vmatprep.subr.mxu0 0.0
    %878 = vmatpush1.msra.mxu0 0.0
    %879 = vmatprep.mubr.f32.mxu0 0.0
    %880 = vmatmul.mubr.f32.gmra.mrb[0].mxu0 %v806
    %v881 = vpop.f32.mrb[0].mxu0
    %v882 = vadd.f32 %v802, %v881
    %v883 = vpop.f32.mrb[0].mxu0
    %884 = vmatprep.mubr.f32.mxu0 0.0
    %885 = vmatmul.mubr.f32.gmra.mrb[0].mxu0 %v809
    %v886 = vpop.f32.mrb[0].mxu0
    %v887 = vadd.f32 %v802, %v886
    %v888 = vpop.f32.mrb[0].mxu0
    %889 = vdwg.mxu0
    %890 = vst [vmem:[%s17] sm:$0xff] %v882
    %891 = vst [vmem:[%s17 + $0x8] sm:$0xff] %v887
    %v892 = vld [vmem:[#allocation10] sm:$0xff]
    %v893 = vld [vmem:[#allocation10 + $0x8] sm:$0xff]
    %v894 = vld [vmem:[#allocation10 + $0x10] sm:$0xff]
    %v895 = vld [vmem:[#allocation10 + $0x18] sm:$0xff]
    %v896 = vld [vmem:[#allocation10 + $0x20] sm:$0xff]
    %v897 = vld [vmem:[#allocation10 + $0x28] sm:$0xff]
    %v898 = vld [vmem:[#allocation10 + $0x30] sm:$0xff]
    %v899 = vld [vmem:[#allocation10 + $0x38] sm:$0xff]
    %v900 = vld [vmem:[#allocation10 + $0x40] sm:$0xff]
    %v901 = vld [vmem:[#allocation10 + $0x48] sm:$0xff]
    %v902 = vld [vmem:[#allocation10 + $0x50] sm:$0xff]
    %v903 = vld [vmem:[#allocation10 + $0x58] sm:$0xff]
    %v904 = vld [vmem:[#allocation10 + $0x60] sm:$0xff]
    %v905 = vld [vmem:[#allocation10 + $0x68] sm:$0xff]
    %v906 = vld [vmem:[#allocation10 + $0x70] sm:$0xff]
    %v907 = vld [vmem:[#allocation10 + $0x78] sm:$0xff]
    %v908 = vld [vmem:[%s10] sm:$0x1]
    %v910 = vlaneseq
    %v911 = vshrl.u32 %v910, 7
    %v912 = vsub.s32 0, %v911
    %v913 = vrot.slane %v908, %v912
    %915 = vmatprep.subr.mxu0 0.0
    %916 = vmatpush1.msra.mxu0 %v892
    %917 = vmatprep.subr.mxu0 0.0
    %918 = vmatpush1.msra.mxu0 %v893
    %919 = vmatprep.subr.mxu0 0.0
    %920 = vmatpush1.msra.mxu0 %v894
    %921 = vmatprep.subr.mxu0 0.0
    %922 = vmatpush1.msra.mxu0 %v895
    %923 = vmatprep.subr.mxu0 0.0
    %924 = vmatpush1.msra.mxu0 %v896
    %925 = vmatprep.subr.mxu0 0.0
    %926 = vmatpush1.msra.mxu0 %v897
    %927 = vmatprep.subr.mxu0 0.0
    %928 = vmatpush1.msra.mxu0 %v898
    %929 = vmatprep.subr.mxu0 0.0
    %930 = vmatpush1.msra.mxu0 %v899
    %931 = vmatprep.subr.mxu0 0.0
    %932 = vmatpush1.msra.mxu0 %v900
    %933 = vmatprep.subr.mxu0 0.0
    %934 = vmatpush1.msra.mxu0 %v901
    %935 = vmatprep.subr.mxu0 0.0
    %936 = vmatpush1.msra.mxu0 %v902
    %937 = vmatprep.subr.mxu0 0.0
    %938 = vmatpush1.msra.mxu0 %v903
    %939 = vmatprep.subr.mxu0 0.0
    %940 = vmatpush1.msra.mxu0 %v904
    %941 = vmatprep.subr.mxu0 0.0
    %942 = vmatpush1.msra.mxu0 %v905
    %943 = vmatprep.subr.mxu0 0.0
    %944 = vmatpush1.msra.mxu0 %v906
    %945 = vmatprep.subr.mxu0 0.0
    %946 = vmatpush1.msra.mxu0 %v907
    %947 = vmatprep.subr.mxu0 0.0
    %948 = vmatpush1.msra.mxu0 0.0
    %949 = vmatprep.subr.mxu0 0.0
    %950 = vmatpush1.msra.mxu0 0.0
    %951 = vmatprep.subr.mxu0 0.0
    %952 = vmatpush1.msra.mxu0 0.0
    %953 = vmatprep.subr.mxu0 0.0
    %954 = vmatpush1.msra.mxu0 0.0
    %955 = vmatprep.subr.mxu0 0.0
    %956 = vmatpush1.msra.mxu0 0.0
    %957 = vmatprep.subr.mxu0 0.0
    %958 = vmatpush1.msra.mxu0 0.0
    %959 = vmatprep.subr.mxu0 0.0
    %960 = vmatpush1.msra.mxu0 0.0
    %961 = vmatprep.subr.mxu0 0.0
    %962 = vmatpush1.msra.mxu0 0.0
    %963 = vmatprep.subr.mxu0 0.0
    %964 = vmatpush1.msra.mxu0 0.0
    %965 = vmatprep.subr.mxu0 0.0
    %966 = vmatpush1.msra.mxu0 0.0
    %967 = vmatprep.subr.mxu0 0.0
    %968 = vmatpush1.msra.mxu0 0.0
    %969 = vmatprep.subr.mxu0 0.0
    %970 = vmatpush1.msra.mxu0 0.0
    %971 = vmatprep.subr.mxu0 0.0
    %972 = vmatpush1.msra.mxu0 0.0
    %973 = vmatprep.subr.mxu0 0.0
    %974 = vmatpush1.msra.mxu0 0.0
    %975 = vmatprep.subr.mxu0 0.0
    %976 = vmatpush1.msra.mxu0 0.0
    %977 = vmatprep.subr.mxu0 0.0
    %978 = vmatpush1.msra.mxu0 0.0
    %979 = vmatprep.mubr.f32.mxu0 0.0
    %980 = vmatmul.mubr.f32.gmra.mrb[0].mxu0 %v882
    %v981 = vpop.f32.mrb[0].mxu0
    %v982 = vadd.f32 %v913, %v981
    %v983 = vpop.f32.mrb[0].mxu0
    %984 = vmatprep.mubr.f32.mxu0 0.0
    %985 = vmatmul.mubr.f32.gmra.mrb[0].mxu0 %v887
    %v986 = vpop.f32.mrb[0].mxu0
    %v987 = vadd.f32 %v913, %v986
    %v988 = vpop.f32.mrb[0].mxu0
    %989 = vdwg.mxu0
    %v990 = vtanh.pop %v982
    %v991 = vtanh.pop %v987
    %v992 = vld [vmem:[#allocation11] sm:$0xff]
    %v993 = vld [vmem:[#allocation11 + $0x8] sm:$0xf]
    %v994 = vld [vmem:[%s12] sm:$0x1]
    %v996 = vlaneseq
    %v997 = vshrl.u32 %v996, 7
    %v998 = vsub.s32 0, %v997
    %v999 = vrot.slane %v994, %v998
    %v1002 = vsel %vm804, %v990, 0
    %v1005 = vsel %vm804, %v991, 0
    %v1008 = vsel %vm811, %v993, 0
    %1010 = vmatprep.subr.mxu0 0.0
    %1011 = vmatpush1.msra.mxu0 %v992
    %1012 = vmatprep.subr.mxu0 0.0
    %1013 = vmatpush1.msra.mxu0 %v1008
    %1014 = vmatprep.subr.mxu0 0.0
    %1015 = vmatpush1.msra.mxu0 0.0
    %1016 = vmatprep.subr.mxu0 0.0
    %1017 = vmatpush1.msra.mxu0 0.0
    %1018 = vmatprep.subr.mxu0 0.0
    %1019 = vmatpush1.msra.mxu0 0.0
    %1020 = vmatprep.subr.mxu0 0.0
    %1021 = vmatpush1.msra.mxu0 0.0
    %1022 = vmatprep.subr.mxu0 0.0
    %1023 = vmatpush1.msra.mxu0 0.0
    %1024 = vmatprep.subr.mxu0 0.0
    %1025 = vmatpush1.msra.mxu0 0.0
    %1026 = vmatprep.subr.mxu0 0.0
    %1027 = vmatpush1.msra.mxu0 0.0
    %1028 = vmatprep.subr.mxu0 0.0
    %1029 = vmatpush1.msra.mxu0 0.0
    %1030 = vmatprep.subr.mxu0 0.0
    %1031 = vmatpush1.msra.mxu0 0.0
    %1032 = vmatprep.subr.mxu0 0.0
    %1033 = vmatpush1.msra.mxu0 0.0
    %1034 = vmatprep.subr.mxu0 0.0
    %1035 = vmatpush1.msra.mxu0 0.0
    %1036 = vmatprep.subr.mxu0 0.0
    %1037 = vmatpush1.msra.mxu0 0.0
    %1038 = vmatprep.subr.mxu0 0.0
    %1039 = vmatpush1.msra.mxu0 0.0
    %1040 = vmatprep.subr.mxu0 0.0
    %1041 = vmatpush1.msra.mxu0 0.0
    %1042 = vmatprep.subr.mxu0 0.0
    %1043 = vmatpush1.msra.mxu0 0.0
    %1044 = vmatprep.subr.mxu0 0.0
    %1045 = vmatpush1.msra.mxu0 0.0
    %1046 = vmatprep.subr.mxu0 0.0
    %1047 = vmatpush1.msra.mxu0 0.0
    %1048 = vmatprep.subr.mxu0 0.0
    %1049 = vmatpush1.msra.mxu0 0.0
    %1050 = vmatprep.subr.mxu0 0.0
    %1051 = vmatpush1.msra.mxu0 0.0
    %1052 = vmatprep.subr.mxu0 0.0
    %1053 = vmatpush1.msra.mxu0 0.0
    %1054 = vmatprep.subr.mxu0 0.0
    %1055 = vmatpush1.msra.mxu0 0.0
    %1056 = vmatprep.subr.mxu0 0.0
    %1057 = vmatpush1.msra.mxu0 0.0
    %1058 = vmatprep.subr.mxu0 0.0
    %1059 = vmatpush1.msra.mxu0 0.0
    %1060 = vmatprep.subr.mxu0 0.0
    %1061 = vmatpush1.msra.mxu0 0.0
    %1062 = vmatprep.subr.mxu0 0.0
    %1063 = vmatpush1.msra.mxu0 0.0
    %1064 = vmatprep.subr.mxu0 0.0
    %1065 = vmatpush1.msra.mxu0 0.0
    %1066 = vmatprep.subr.mxu0 0.0
    %1067 = vmatpush1.msra.mxu0 0.0
    %1068 = vmatprep.subr.mxu0 0.0
    %1069 = vmatpush1.msra.mxu0 0.0
    %1070 = vmatprep.subr.mxu0 0.0
    %1071 = vmatpush1.msra.mxu0 0.0
    %1072 = vmatprep.subr.mxu0 0.0
    %1073 = vmatpush1.msra.mxu0 0.0
    %1074 = vmatprep.mubr.f32.mxu0 0.0
    %1075 = vmatmul.mubr.f32.gmra.mrb[0].mxu0 %v1002
    %v1076 = vpop.f32.mrb[0].mxu0
    %v1077 = vadd.f32 %v999, %v1076
    %v1078 = vpop.f32.mrb[0].mxu0
    %1079 = vmatprep.mubr.f32.mxu0 0.0
    %1080 = vmatmul.mubr.f32.gmra.mrb[0].mxu0 %v1005
    %v1081 = vpop.f32.mrb[0].mxu0
    %v1082 = vadd.f32 %v999, %v1081
    %v1083 = vpop.f32.mrb[0].mxu0
    %1084 = vdwg.mxu0
    %v1085 = vtanh.pop %v1077
    %v1086 = vtanh.pop %v1082
    %v1087 = vld [vmem:[#allocation13] sm:$0xff]
    %v1088 = vld [vmem:[#allocation13 + $0x8] sm:$0xff]
    %v1089 = vld [vmem:[#allocation13 + $0x10] sm:$0xff]
    %v1090 = vld [vmem:[#allocation13 + $0x18] sm:$0xff]
    %v1091 = vld [vmem:[#allocation13 + $0x20] sm:$0xff]
    %v1092 = vld [vmem:[#allocation13 + $0x28] sm:$0xff]
    %v1093 = vld [vmem:[#allocation13 + $0x30] sm:$0xff]
    %v1094 = vld [vmem:[#allocation13 + $0x38] sm:$0xff]
    %v1095 = vld [vmem:[%s14] sm:$0x1]
    %v1097 = vlaneseq
    %v1098 = vshrl.u32 %v1097, 7
    %v1099 = vsub.s32 0, %v1098
    %v1100 = vrot.slane %v1095, %v1099
    %v1103 = vsel %vm711, %v1085, 0
    %v1106 = vsel %vm711, %v1086, 0
    %1108 = vmatprep.subr.mxu0 0.0
    %1109 = vmatpush1.msra.mxu0 %v1087
    %1110 = vmatprep.subr.mxu0 0.0
    %1111 = vmatpush1.msra.mxu0 %v1088
    %1112 = vmatprep.subr.mxu0 0.0
    %1113 = vmatpush1.msra.mxu0 %v1089
    %1114 = vmatprep.subr.mxu0 0.0
    %1115 = vmatpush1.msra.mxu0 %v1090
    %1116 = vmatprep.subr.mxu0 0.0
    %1117 = vmatpush1.msra.mxu0 %v1091
    %1118 = vmatprep.subr.mxu0 0.0
    %1119 = vmatpush1.msra.mxu0 %v1092
    %1120 = vmatprep.subr.mxu0 0.0
    %1121 = vmatpush1.msra.mxu0 %v1093
    %1122 = vmatprep.subr.mxu0 0.0
    %1123 = vmatpush1.msra.mxu0 %v1094
    %1124 = vmatprep.subr.mxu0 0.0
    %1125 = vmatpush1.msra.mxu0 0.0
    %1126 = vmatprep.subr.mxu0 0.0
    %1127 = vmatpush1.msra.mxu0 0.0
    %1128 = vmatprep.subr.mxu0 0.0
    %1129 = vmatpush1.msra.mxu0 0.0
    %1130 = vmatprep.subr.mxu0 0.0
    %1131 = vmatpush1.msra.mxu0 0.0
    %1132 = vmatprep.subr.mxu0 0.0
    %1133 = vmatpush1.msra.mxu0 0.0
    %1134 = vmatprep.subr.mxu0 0.0
    %1135 = vmatpush1.msra.mxu0 0.0
    %1136 = vmatprep.subr.mxu0 0.0
    %1137 = vmatpush1.msra.mxu0 0.0
    %1138 = vmatprep.subr.mxu0 0.0
    %1139 = vmatpush1.msra.mxu0 0.0
    %1140 = vmatprep.subr.mxu0 0.0
    %1141 = vmatpush1.msra.mxu0 0.0
    %1142 = vmatprep.subr.mxu0 0.0
    %1143 = vmatpush1.msra.mxu0 0.0
    %1144 = vmatprep.subr.mxu0 0.0
    %1145 = vmatpush1.msra.mxu0 0.0
    %1146 = vmatprep.subr.mxu0 0.0
    %1147 = vmatpush1.msra.mxu0 0.0
    %1148 = vmatprep.subr.mxu0 0.0
    %1149 = vmatpush1.msra.mxu0 0.0
    %1150 = vmatprep.subr.mxu0 0.0
    %1151 = vmatpush1.msra.mxu0 0.0
    %1152 = vmatprep.subr.mxu0 0.0
    %1153 = vmatpush1.msra.mxu0 0.0
    %1154 = vmatprep.subr.mxu0 0.0
    %1155 = vmatpush1.msra.mxu0 0.0
    %1156 = vmatprep.subr.mxu0 0.0
    %1157 = vmatpush1.msra.mxu0 0.0
    %1158 = vmatprep.subr.mxu0 0.0
    %1159 = vmatpush1.msra.mxu0 0.0
    %1160 = vmatprep.subr.mxu0 0.0
    %1161 = vmatpush1.msra.mxu0 0.0
    %1162 = vmatprep.subr.mxu0 0.0
    %1163 = vmatpush1.msra.mxu0 0.0
    %1164 = vmatprep.subr.mxu0 0.0
    %1165 = vmatpush1.msra.mxu0 0.0
    %1166 = vmatprep.subr.mxu0 0.0
    %1167 = vmatpush1.msra.mxu0 0.0
    %1168 = vmatprep.subr.mxu0 0.0
    %1169 = vmatpush1.msra.mxu0 0.0
    %1170 = vmatprep.subr.mxu0 0.0
    %1171 = vmatpush1.msra.mxu0 0.0
    %1172 = vmatprep.mubr.f32.mxu0 0.0
    %1173 = vmatmul.mubr.f32.gmra.mrb[0].mxu0 %v1103
    %v1174 = vpop.f32.mrb[0].mxu0
    %v1175 = vadd.f32 %v1100, %v1174
    %v1176 = vpop.f32.mrb[0].mxu0
    %1177 = vmatprep.mubr.f32.mxu0 0.0
    %1178 = vmatmul.mubr.f32.gmra.mrb[0].mxu0 %v1106
    %v1179 = vpop.f32.mrb[0].mxu0
    %v1180 = vadd.f32 %v1100, %v1179
    %v1181 = vpop.f32.mrb[0].mxu0
    %1182 = vdwg.mxu0
    %v1183 = vtanh.pop %v1175
    %v1184 = vtanh.pop %v1180
    %v1185 = vld [vmem:[#allocation14] sm:$0xff]
    %v1186 = vld [vmem:[#allocation14 + $0x8] sm:$0xff]
    %v1187 = vld [vmem:[#allocation14 + $0x10] sm:$0xff]
    %v1188 = vld [vmem:[#allocation14 + $0x18] sm:$0xff]
    %v1189 = vld [vmem:[#allocation14 + $0x20] sm:$0xff]
    %v1190 = vld [vmem:[#allocation14 + $0x28] sm:$0xff]
    %v1191 = vld [vmem:[#allocation14 + $0x30] sm:$0xff]
    %v1192 = vld [vmem:[#allocation14 + $0x38] sm:$0xff]
    %v1193 = vld [vmem:[#allocation14 + $0x40] sm:$0xff]
    %v1194 = vld [vmem:[#allocation14 + $0x48] sm:$0xff]
    %v1195 = vld [vmem:[#allocation14 + $0x50] sm:$0xff]
    %v1196 = vld [vmem:[#allocation14 + $0x58] sm:$0xff]
    %v1197 = vld [vmem:[#allocation14 + $0x60] sm:$0xff]
    %v1198 = vld [vmem:[#allocation14 + $0x68] sm:$0xff]
    %v1199 = vld [vmem:[#allocation14 + $0x70] sm:$0xff]
    %v1200 = vld [vmem:[#allocation14 + $0x78] sm:$0xff]
    %v1201 = vld [vmem:[#allocation14 + $0x80] sm:$0xff]
    %v1202 = vld [vmem:[#allocation14 + $0x88] sm:$0xff]
    %v1203 = vld [vmem:[#allocation14 + $0x90] sm:$0xff]
    %v1204 = vld [vmem:[#allocation14 + $0x98] sm:$0xff]
    %v1205 = vld [vmem:[#allocation14 + $0xa0] sm:$0xff]
    %v1206 = vld [vmem:[#allocation14 + $0xa8] sm:$0xff]
    %v1207 = vld [vmem:[#allocation14 + $0xb0] sm:$0xff]
    %v1208 = vld [vmem:[#allocation14 + $0xb8] sm:$0xff]
    %v1209 = vld [vmem:[#allocation14 + $0xc0] sm:$0xff]
    %v1210 = vld [vmem:[#allocation14 + $0xc8] sm:$0xff]
    %v1211 = vld [vmem:[#allocation14 + $0xd0] sm:$0xff]
    %v1212 = vld [vmem:[#allocation14 + $0xd8] sm:$0xff]
    %v1213 = vld [vmem:[#allocation14 + $0xe0] sm:$0xff]
    %v1214 = vld [vmem:[#allocation14 + $0xe8] sm:$0xff]
    %v1215 = vld [vmem:[#allocation14 + $0xf0] sm:$0xff]
    %v1216 = vld [vmem:[#allocation14 + $0xf8] sm:$0xff]
    %v1217 = vld [vmem:[#allocation14 + $0x100] sm:$0xff]
    %v1218 = vld [vmem:[#allocation14 + $0x108] sm:$0xff]
    %v1219 = vld [vmem:[#allocation14 + $0x110] sm:$0xff]
    %v1220 = vld [vmem:[#allocation14 + $0x118] sm:$0xff]
    %v1221 = vld [vmem:[#allocation14 + $0x120] sm:$0xff]
    %v1222 = vld [vmem:[#allocation14 + $0x128] sm:$0xff]
    %v1223 = vld [vmem:[#allocation14 + $0x130] sm:$0xff]
    %v1224 = vld [vmem:[#allocation14 + $0x138] sm:$0xff]
    %v1225 = vld [vmem:[#allocation14 + $0x140] sm:$0xff]
    %v1226 = vld [vmem:[#allocation14 + $0x148] sm:$0xff]
    %v1227 = vld [vmem:[#allocation14 + $0x150] sm:$0xff]
    %v1228 = vld [vmem:[#allocation14 + $0x158] sm:$0xff]
    %v1229 = vld [vmem:[#allocation14 + $0x160] sm:$0xff]
    %v1230 = vld [vmem:[#allocation14 + $0x168] sm:$0xff]
    %v1231 = vld [vmem:[#allocation14 + $0x170] sm:$0xff]
    %v1232 = vld [vmem:[#allocation14 + $0x178] sm:$0xff]
    %v1233 = vld [vmem:[#allocation14 + $0x180] sm:$0xff]
    %v1234 = vld [vmem:[#allocation14 + $0x188] sm:$0xff]
    %v1235 = vld [vmem:[#allocation14 + $0x190] sm:$0xff]
    %v1236 = vld [vmem:[#allocation14 + $0x198] sm:$0xff]
    %v1237 = vld [vmem:[#allocation14 + $0x1a0] sm:$0xff]
    %v1238 = vld [vmem:[#allocation14 + $0x1a8] sm:$0xff]
    %v1239 = vld [vmem:[#allocation14 + $0x1b0] sm:$0xff]
    %v1240 = vld [vmem:[#allocation14 + $0x1b8] sm:$0xff]
    %v1241 = vld [vmem:[#allocation14 + $0x1c0] sm:$0xff]
    %v1242 = vld [vmem:[#allocation14 + $0x1c8] sm:$0xff]
    %v1243 = vld [vmem:[#allocation14 + $0x1d0] sm:$0xff]
    %v1244 = vld [vmem:[#allocation14 + $0x1d8] sm:$0xff]
    %v1245 = vld [vmem:[#allocation14 + $0x1e0] sm:$0xff]
    %v1246 = vld [vmem:[#allocation14 + $0x1e8] sm:$0xff]
    %v1247 = vld [vmem:[#allocation14 + $0x1f0] sm:$0xff]
    %v1248 = vld [vmem:[#allocation14 + $0x1f8] sm:$0xff]
    %v1249 = vld [vmem:[#allocation14 + $0x200] sm:$0xff]
    %v1250 = vld [vmem:[#allocation14 + $0x208] sm:$0xff]
    %v1251 = vld [vmem:[#allocation14 + $0x210] sm:$0xff]
    %v1252 = vld [vmem:[#allocation14 + $0x218] sm:$0xff]
    %v1253 = vld [vmem:[#allocation14 + $0x220] sm:$0xff]
    %v1254 = vld [vmem:[#allocation14 + $0x228] sm:$0xff]
    %v1255 = vld [vmem:[#allocation14 + $0x230] sm:$0xff]
    %v1256 = vld [vmem:[#allocation14 + $0x238] sm:$0xff]
    %v1257 = vld [vmem:[#allocation14 + $0x240] sm:$0xff]
    %v1258 = vld [vmem:[#allocation14 + $0x248] sm:$0xff]
    %v1259 = vld [vmem:[#allocation14 + $0x250] sm:$0xff]
    %v1260 = vld [vmem:[#allocation14 + $0x258] sm:$0xff]
    %v1261 = vld [vmem:[#allocation14 + $0x260] sm:$0xff]
    %v1262 = vld [vmem:[#allocation14 + $0x268] sm:$0xff]
    %v1263 = vld [vmem:[#allocation14 + $0x270] sm:$0xff]
    %v1264 = vld [vmem:[#allocation14 + $0x278] sm:$0xff]
    %v1265 = vld [vmem:[#allocation14 + $0x280] sm:$0xff]
    %v1266 = vld [vmem:[#allocation14 + $0x288] sm:$0xff]
    %v1267 = vld [vmem:[#allocation14 + $0x290] sm:$0xff]
    %v1268 = vld [vmem:[#allocation14 + $0x298] sm:$0xff]
    %v1269 = vld [vmem:[#allocation14 + $0x2a0] sm:$0xff]
    %v1270 = vld [vmem:[#allocation14 + $0x2a8] sm:$0xff]
    %v1271 = vld [vmem:[#allocation14 + $0x2b0] sm:$0xff]
    %v1272 = vld [vmem:[#allocation14 + $0x2b8] sm:$0xff]
    %v1273 = vld [vmem:[#allocation14 + $0x2c0] sm:$0xff]
    %v1274 = vld [vmem:[#allocation14 + $0x2c8] sm:$0xff]
    %v1275 = vld [vmem:[#allocation14 + $0x2d0] sm:$0xff]
    %v1276 = vld [vmem:[#allocation14 + $0x2d8] sm:$0xff]
    %v1277 = vld [vmem:[#allocation14 + $0x2e0] sm:$0xff]
    %v1278 = vld [vmem:[#allocation14 + $0x2e8] sm:$0xff]
    %v1279 = vld [vmem:[#allocation14 + $0x2f0] sm:$0xff]
    %v1280 = vld [vmem:[#allocation14 + $0x2f8] sm:$0xff]
    %v1281 = vld [vmem:[#allocation14 + $0x300] sm:$0xff]
    %v1282 = vld [vmem:[#allocation14 + $0x308] sm:$0xff]
    %v1283 = vld [vmem:[#allocation14 + $0x310] sm:$0xff]
    %v1284 = vld [vmem:[#allocation14 + $0x318] sm:$0xff]
    %v1285 = vld [vmem:[#allocation14 + $0x320] sm:$0xff]
    %v1286 = vld [vmem:[#allocation14 + $0x328] sm:$0xff]
    %v1287 = vld [vmem:[#allocation14 + $0x330] sm:$0xff]
    %v1288 = vld [vmem:[#allocation14 + $0x338] sm:$0xff]
    %v1289 = vld [vmem:[#allocation14 + $0x340] sm:$0xff]
    %v1290 = vld [vmem:[#allocation14 + $0x348] sm:$0xff]
    %v1291 = vld [vmem:[#allocation14 + $0x350] sm:$0xff]
    %v1292 = vld [vmem:[#allocation14 + $0x358] sm:$0xff]
    %v1293 = vld [vmem:[#allocation14 + $0x360] sm:$0xff]
    %v1294 = vld [vmem:[#allocation14 + $0x368] sm:$0xff]
    %v1295 = vld [vmem:[#allocation14 + $0x370] sm:$0xff]
    %v1296 = vld [vmem:[#allocation14 + $0x378] sm:$0xff]
    %v1297 = vld [vmem:[%s16] sm:$0x7f]
    %v1299 = vlaneseq
    %v1300 = vshrl.u32 %v1299, 7
    %v1301 = vsub.s32 0, %v1300
    %v1302 = vrot.slane %v1297, %v1301
    %v1303 = vlaneseq
    %v1304 = vshrl.u32 %v1303, 7
    %v1305 = vsub.s32 1, %v1304
    %v1306 = vrot.slane %v1297, %v1305
    %v1307 = vlaneseq
    %v1308 = vshrl.u32 %v1307, 7
    %v1309 = vsub.s32 2, %v1308
    %v1310 = vrot.slane %v1297, %v1309
    %v1311 = vlaneseq
    %v1312 = vshrl.u32 %v1311, 7
    %v1313 = vsub.s32 3, %v1312
    %v1314 = vrot.slane %v1297, %v1313
    %v1315 = vlaneseq
    %v1316 = vshrl.u32 %v1315, 7
    %v1317 = vsub.s32 4, %v1316
    %v1318 = vrot.slane %v1297, %v1317
    %v1319 = vlaneseq
    %v1320 = vshrl.u32 %v1319, 7
    %v1321 = vsub.s32 5, %v1320
    %v1322 = vrot.slane %v1297, %v1321
    %v1323 = vlaneseq
    %v1324 = vshrl.u32 %v1323, 7
    %v1325 = vsub.s32 6, %v1324
    %v1326 = vrot.slane %v1297, %v1325
    %1334 = vmatprep.subr.mxu0 %v1186
    %1335 = vmatpush1.msra.mxu0 %v1185
    %1336 = vmatprep.subr.mxu0 %v1193
    %1337 = vmatpush1.msra.mxu0 %v1192
    %1338 = vmatprep.subr.mxu0 %v1200
    %1339 = vmatpush1.msra.mxu0 %v1199
    %1340 = vmatprep.subr.mxu0 %v1207
    %1341 = vmatpush1.msra.mxu0 %v1206
    %1342 = vmatprep.subr.mxu0 %v1214
    %1343 = vmatpush1.msra.mxu0 %v1213
    %1344 = vmatprep.subr.mxu0 %v1221
    %1345 = vmatpush1.msra.mxu0 %v1220
    %1346 = vmatprep.subr.mxu0 %v1228
    %1347 = vmatpush1.msra.mxu0 %v1227
    %1348 = vmatprep.subr.mxu0 %v1235
    %1349 = vmatpush1.msra.mxu0 %v1234
    %1350 = vmatprep.subr.mxu0 %v1242
    %1351 = vmatpush1.msra.mxu0 %v1241
    %1352 = vmatprep.subr.mxu0 %v1249
    %1353 = vmatpush1.msra.mxu0 %v1248
    %1354 = vmatprep.subr.mxu0 %v1256
    %1355 = vmatpush1.msra.mxu0 %v1255
    %1356 = vmatprep.subr.mxu0 %v1263
    %1357 = vmatpush1.msra.mxu0 %v1262
    %1358 = vmatprep.subr.mxu0 %v1270
    %1359 = vmatpush1.msra.mxu0 %v1269
    %1360 = vmatprep.subr.mxu0 %v1277
    %1361 = vmatpush1.msra.mxu0 %v1276
    %1362 = vmatprep.subr.mxu0 %v1284
    %1363 = vmatpush1.msra.mxu0 %v1283
    %1364 = vmatprep.subr.mxu0 %v1291
    %1365 = vmatpush1.msra.mxu0 %v1290
    %1366 = vmatprep.subr.mxu0 0.0
    %1367 = vmatpush1.msra.mxu0 0.0
    %1368 = vmatprep.subr.mxu0 0.0
    %1369 = vmatpush1.msra.mxu0 0.0
    %1370 = vmatprep.subr.mxu0 0.0
    %1371 = vmatpush1.msra.mxu0 0.0
    %1372 = vmatprep.subr.mxu0 0.0
    %1373 = vmatpush1.msra.mxu0 0.0
    %1374 = vmatprep.subr.mxu0 0.0
    %1375 = vmatpush1.msra.mxu0 0.0
    %1376 = vmatprep.subr.mxu0 0.0
    %1377 = vmatpush1.msra.mxu0 0.0
    %1378 = vmatprep.subr.mxu0 0.0
    %1379 = vmatpush1.msra.mxu0 0.0
    %1380 = vmatprep.subr.mxu0 0.0
    %1381 = vmatpush1.msra.mxu0 0.0
    %1382 = vmatprep.subr.mxu0 0.0
    %1383 = vmatpush1.msra.mxu0 0.0
    %1384 = vmatprep.subr.mxu0 0.0
    %1385 = vmatpush1.msra.mxu0 0.0
    %1386 = vmatprep.subr.mxu0 0.0
    %1387 = vmatpush1.msra.mxu0 0.0
    %1388 = vmatprep.subr.mxu0 0.0
    %1389 = vmatpush1.msra.mxu0 0.0
    %1390 = vmatprep.subr.mxu0 0.0
    %1391 = vmatpush1.msra.mxu0 0.0
    %1392 = vmatprep.subr.mxu0 0.0
    %1393 = vmatpush1.msra.mxu0 0.0
    %1394 = vmatprep.subr.mxu0 0.0
    %1395 = vmatpush1.msra.mxu0 0.0
    %1396 = vmatprep.subr.mxu0 0.0
    %1397 = vmatpush1.msra.mxu0 0.0
    %1398 = vmatprep.mubr.f32.mxu0 0.0
    %1399 = vmatmul.mubr.f32.gmra.mrb[0].mxu0 %v1183
    %v1400 = vpop.f32.mrb[0].mxu0
    %v1401 = vadd.f32 %v1302, %v1400
    %v1402 = vpop.f32.mrb[0].mxu0
    %v1403 = vadd.f32 %v1306, %v1402
    %1404 = vmatprep.mubr.f32.mxu0 0.0
    %1405 = vmatmul.mubr.f32.gmra.mrb[0].mxu0 %v1184
    %v1406 = vpop.f32.mrb[0].mxu0
    %v1407 = vadd.f32 %v1302, %v1406
    %v1408 = vpop.f32.mrb[0].mxu0
    %v1409 = vadd.f32 %v1306, %v1408
    %1410 = vdwg.mxu0
    %1411 = vmatprep.subr.mxu0 %v1188
    %1412 = vmatpush1.msra.mxu0 %v1187
    %1413 = vmatprep.subr.mxu0 %v1195
    %1414 = vmatpush1.msra.mxu0 %v1194
    %1415 = vmatprep.subr.mxu0 %v1202
    %1416 = vmatpush1.msra.mxu0 %v1201
    %1417 = vmatprep.subr.mxu0 %v1209
    %1418 = vmatpush1.msra.mxu0 %v1208
    %1419 = vmatprep.subr.mxu0 %v1216
    %1420 = vmatpush1.msra.mxu0 %v1215
    %1421 = vmatprep.subr.mxu0 %v1223
    %1422 = vmatpush1.msra.mxu0 %v1222
    %1423 = vmatprep.subr.mxu0 %v1230
    %1424 = vmatpush1.msra.mxu0 %v1229
    %1425 = vmatprep.subr.mxu0 %v1237
    %1426 = vmatpush1.msra.mxu0 %v1236
    %1427 = vmatprep.subr.mxu0 %v1244
    %1428 = vmatpush1.msra.mxu0 %v1243
    %1429 = vmatprep.subr.mxu0 %v1251
    %1430 = vmatpush1.msra.mxu0 %v1250
    %1431 = vmatprep.subr.mxu0 %v1258
    %1432 = vmatpush1.msra.mxu0 %v1257
    %1433 = vmatprep.subr.mxu0 %v1265
    %1434 = vmatpush1.msra.mxu0 %v1264
    %1435 = vmatprep.subr.mxu0 %v1272
    %1436 = vmatpush1.msra.mxu0 %v1271
    %1437 = vmatprep.subr.mxu0 %v1279
    %1438 = vmatpush1.msra.mxu0 %v1278
    %1439 = vmatprep.subr.mxu0 %v1286
    %1440 = vmatpush1.msra.mxu0 %v1285
    %1441 = vmatprep.subr.mxu0 %v1293
    %1442 = vmatpush1.msra.mxu0 %v1292
    %1443 = vmatprep.subr.mxu0 0.0
    %1444 = vmatpush1.msra.mxu0 0.0
    %1445 = vmatprep.subr.mxu0 0.0
    %1446 = vmatpush1.msra.mxu0 0.0
    %1447 = vmatprep.subr.mxu0 0.0
    %1448 = vmatpush1.msra.mxu0 0.0
    %1449 = vmatprep.subr.mxu0 0.0
    %1450 = vmatpush1.msra.mxu0 0.0
    %1451 = vmatprep.subr.mxu0 0.0
    %1452 = vmatpush1.msra.mxu0 0.0
    %1453 = vmatprep.subr.mxu0 0.0
    %1454 = vmatpush1.msra.mxu0 0.0
    %1455 = vmatprep.subr.mxu0 0.0
    %1456 = vmatpush1.msra.mxu0 0.0
    %1457 = vmatprep.subr.mxu0 0.0
    %1458 = vmatpush1.msra.mxu0 0.0
    %1459 = vmatprep.subr.mxu0 0.0
    %1460 = vmatpush1.msra.mxu0 0.0
    %1461 = vmatprep.subr.mxu0 0.0
    %1462 = vmatpush1.msra.mxu0 0.0
    %1463 = vmatprep.subr.mxu0 0.0
    %1464 = vmatpush1.msra.mxu0 0.0
    %1465 = vmatprep.subr.mxu0 0.0
    %1466 = vmatpush1.msra.mxu0 0.0
    %1467 = vmatprep.subr.mxu0 0.0
    %1468 = vmatpush1.msra.mxu0 0.0
    %1469 = vmatprep.subr.mxu0 0.0
    %1470 = vmatpush1.msra.mxu0 0.0
    %1471 = vmatprep.subr.mxu0 0.0
    %1472 = vmatpush1.msra.mxu0 0.0
    %1473 = vmatprep.subr.mxu0 0.0
    %1474 = vmatpush1.msra.mxu0 0.0
    %1475 = vmatprep.mubr.f32.mxu0 0.0
    %1476 = vmatmul.mubr.f32.gmra.mrb[0].mxu0 %v1183
    %v1477 = vpop.f32.mrb[0].mxu0
    %v1478 = vadd.f32 %v1310, %v1477
    %v1479 = vpop.f32.mrb[0].mxu0
    %v1480 = vadd.f32 %v1314, %v1479
    %1481 = vmatprep.mubr.f32.mxu0 0.0
    %1482 = vmatmul.mubr.f32.gmra.mrb[0].mxu0 %v1184
    %v1483 = vpop.f32.mrb[0].mxu0
    %v1484 = vadd.f32 %v1310, %v1483
    %v1485 = vpop.f32.mrb[0].mxu0
    %v1486 = vadd.f32 %v1314, %v1485
    %1487 = vdwg.mxu0
    %1488 = vmatprep.subr.mxu0 %v1190
    %1489 = vmatpush1.msra.mxu0 %v1189
    %1490 = vmatprep.subr.mxu0 %v1197
    %1491 = vmatpush1.msra.mxu0 %v1196
    %1492 = vmatprep.subr.mxu0 %v1204
    %1493 = vmatpush1.msra.mxu0 %v1203
    %1494 = vmatprep.subr.mxu0 %v1211
    %1495 = vmatpush1.msra.mxu0 %v1210
    %1496 = vmatprep.subr.mxu0 %v1218
    %1497 = vmatpush1.msra.mxu0 %v1217
    %1498 = vmatprep.subr.mxu0 %v1225
    %1499 = vmatpush1.msra.mxu0 %v1224
    %1500 = vmatprep.subr.mxu0 %v1232
    %1501 = vmatpush1.msra.mxu0 %v1231
    %1502 = vmatprep.subr.mxu0 %v1239
    %1503 = vmatpush1.msra.mxu0 %v1238
    %1504 = vmatprep.subr.mxu0 %v1246
    %1505 = vmatpush1.msra.mxu0 %v1245
    %1506 = vmatprep.subr.mxu0 %v1253
    %1507 = vmatpush1.msra.mxu0 %v1252
    %1508 = vmatprep.subr.mxu0 %v1260
    %1509 = vmatpush1.msra.mxu0 %v1259
    %1510 = vmatprep.subr.mxu0 %v1267
    %1511 = vmatpush1.msra.mxu0 %v1266
    %1512 = vmatprep.subr.mxu0 %v1274
    %1513 = vmatpush1.msra.mxu0 %v1273
    %1514 = vmatprep.subr.mxu0 %v1281
    %1515 = vmatpush1.msra.mxu0 %v1280
    %1516 = vmatprep.subr.mxu0 %v1288
    %1517 = vmatpush1.msra.mxu0 %v1287
    %1518 = vmatprep.subr.mxu0 %v1295
    %1519 = vmatpush1.msra.mxu0 %v1294
    %1520 = vmatprep.subr.mxu0 0.0
    %1521 = vmatpush1.msra.mxu0 0.0
    %1522 = vmatprep.subr.mxu0 0.0
    %1523 = vmatpush1.msra.mxu0 0.0
    %1524 = vmatprep.subr.mxu0 0.0
    %1525 = vmatpush1.msra.mxu0 0.0
    %1526 = vmatprep.subr.mxu0 0.0
    %1527 = vmatpush1.msra.mxu0 0.0
    %1528 = vmatprep.subr.mxu0 0.0
    %1529 = vmatpush1.msra.mxu0 0.0
    %1530 = vmatprep.subr.mxu0 0.0
    %1531 = vmatpush1.msra.mxu0 0.0
    %1532 = vmatprep.subr.mxu0 0.0
    %1533 = vmatpush1.msra.mxu0 0.0
    %1534 = vmatprep.subr.mxu0 0.0
    %1535 = vmatpush1.msra.mxu0 0.0
    %1536 = vmatprep.subr.mxu0 0.0
    %1537 = vmatpush1.msra.mxu0 0.0
    %1538 = vmatprep.subr.mxu0 0.0
    %1539 = vmatpush1.msra.mxu0 0.0
    %1540 = vmatprep.subr.mxu0 0.0
    %1541 = vmatpush1.msra.mxu0 0.0
    %1542 = vmatprep.subr.mxu0 0.0
    %1543 = vmatpush1.msra.mxu0 0.0
    %1544 = vmatprep.subr.mxu0 0.0
    %1545 = vmatpush1.msra.mxu0 0.0
    %1546 = vmatprep.subr.mxu0 0.0
    %1547 = vmatpush1.msra.mxu0 0.0
    %1548 = vmatprep.subr.mxu0 0.0
    %1549 = vmatpush1.msra.mxu0 0.0
    %1550 = vmatprep.subr.mxu0 0.0
    %1551 = vmatpush1.msra.mxu0 0.0
    %1552 = vmatprep.mubr.f32.mxu0 0.0
    %1553 = vmatmul.mubr.f32.gmra.mrb[0].mxu0 %v1183
    %v1554 = vpop.f32.mrb[0].mxu0
    %v1555 = vadd.f32 %v1318, %v1554
    %v1556 = vpop.f32.mrb[0].mxu0
    %v1557 = vadd.f32 %v1322, %v1556
    %1558 = vmatprep.mubr.f32.mxu0 0.0
    %1559 = vmatmul.mubr.f32.gmra.mrb[0].mxu0 %v1184
    %v1560 = vpop.f32.mrb[0].mxu0
    %v1561 = vadd.f32 %v1318, %v1560
    %v1562 = vpop.f32.mrb[0].mxu0
    %v1563 = vadd.f32 %v1322, %v1562
    %1564 = vdwg.mxu0
    %1565 = vmatprep.subr.mxu0 0.0
    %1566 = vmatpush1.msra.mxu0 %v1191
    %1567 = vmatprep.subr.mxu0 0.0
    %1568 = vmatpush1.msra.mxu0 %v1198
    %1569 = vmatprep.subr.mxu0 0.0
    %1570 = vmatpush1.msra.mxu0 %v1205
    %1571 = vmatprep.subr.mxu0 0.0
    %1572 = vmatpush1.msra.mxu0 %v1212
    %1573 = vmatprep.subr.mxu0 0.0
    %1574 = vmatpush1.msra.mxu0 %v1219
    %1575 = vmatprep.subr.mxu0 0.0
    %1576 = vmatpush1.msra.mxu0 %v1226
    %1577 = vmatprep.subr.mxu0 0.0
    %1578 = vmatpush1.msra.mxu0 %v1233
    %1579 = vmatprep.subr.mxu0 0.0
    %1580 = vmatpush1.msra.mxu0 %v1240
    %1581 = vmatprep.subr.mxu0 0.0
    %1582 = vmatpush1.msra.mxu0 %v1247
    %1583 = vmatprep.subr.mxu0 0.0
    %1584 = vmatpush1.msra.mxu0 %v1254
    %1585 = vmatprep.subr.mxu0 0.0
    %1586 = vmatpush1.msra.mxu0 %v1261
    %1587 = vmatprep.subr.mxu0 0.0
    %1588 = vmatpush1.msra.mxu0 %v1268
    %1589 = vmatprep.subr.mxu0 0.0
    %1590 = vmatpush1.msra.mxu0 %v1275
    %1591 = vmatprep.subr.mxu0 0.0
    %1592 = vmatpush1.msra.mxu0 %v1282
    %1593 = vmatprep.subr.mxu0 0.0
    %1594 = vmatpush1.msra.mxu0 %v1289
    %1595 = vmatprep.subr.mxu0 0.0
    %1596 = vmatpush1.msra.mxu0 %v1296
    %1597 = vmatprep.subr.mxu0 0.0
    %1598 = vmatpush1.msra.mxu0 0.0
    %1599 = vmatprep.subr.mxu0 0.0
    %1600 = vmatpush1.msra.mxu0 0.0
    %1601 = vmatprep.subr.mxu0 0.0
    %1602 = vmatpush1.msra.mxu0 0.0
    %1603 = vmatprep.subr.mxu0 0.0
    %1604 = vmatpush1.msra.mxu0 0.0
    %1605 = vmatprep.subr.mxu0 0.0
    %1606 = vmatpush1.msra.mxu0 0.0
    %1607 = vmatprep.subr.mxu0 0.0
    %1608 = vmatpush1.msra.mxu0 0.0
    %1609 = vmatprep.subr.mxu0 0.0
    %1610 = vmatpush1.msra.mxu0 0.0
    %1611 = vmatprep.subr.mxu0 0.0
    %1612 = vmatpush1.msra.mxu0 0.0
    %1613 = vmatprep.subr.mxu0 0.0
    %1614 = vmatpush1.msra.mxu0 0.0
    %1615 = vmatprep.subr.mxu0 0.0
    %1616 = vmatpush1.msra.mxu0 0.0
    %1617 = vmatprep.subr.mxu0 0.0
    %1618 = vmatpush1.msra.mxu0 0.0
    %1619 = vmatprep.subr.mxu0 0.0
    %1620 = vmatpush1.msra.mxu0 0.0
    %1621 = vmatprep.subr.mxu0 0.0
    %1622 = vmatpush1.msra.mxu0 0.0
    %1623 = vmatprep.subr.mxu0 0.0
    %1624 = vmatpush1.msra.mxu0 0.0
    %1625 = vmatprep.subr.mxu0 0.0
    %1626 = vmatpush1.msra.mxu0 0.0
    %1627 = vmatprep.subr.mxu0 0.0
    %1628 = vmatpush1.msra.mxu0 0.0
    %1629 = vmatprep.mubr.f32.mxu0 0.0
    %1630 = vmatmul.mubr.f32.gmra.mrb[0].mxu0 %v1183
    %v1631 = vpop.f32.mrb[0].mxu0
    %v1632 = vadd.f32 %v1326, %v1631
    %v1633 = vpop.f32.mrb[0].mxu0
    %1634 = vmatprep.mubr.f32.mxu0 0.0
    %1635 = vmatmul.mubr.f32.gmra.mrb[0].mxu0 %v1184
    %v1636 = vpop.f32.mrb[0].mxu0
    %v1637 = vadd.f32 %v1326, %v1636
    %v1638 = vpop.f32.mrb[0].mxu0
    %1639 = vdwg.mxu0
    %1640 = vst [vmem:[#allocation16] sm:$0xff] %v1401
    %1641 = vst [vmem:[#allocation16 + $0x8] sm:$0xff] %v1403
    %1642 = vst [vmem:[#allocation16 + $0x10] sm:$0xff] %v1478
    %1643 = vst [vmem:[#allocation16 + $0x18] sm:$0xff] %v1480
    %1644 = vst [vmem:[#allocation16 + $0x20] sm:$0xff] %v1555
    %1645 = vst [vmem:[#allocation16 + $0x28] sm:$0xff] %v1557
    %1646 = vst.msk [vmem:[#allocation16 + $0x30] sm:$0xff] %vm287, %v1632
    %1647 = vst [vmem:[#allocation16 + $0x38] sm:$0xff] %v1407
    %1648 = vst [vmem:[#allocation16 + $0x40] sm:$0xff] %v1409
    %1649 = vst [vmem:[#allocation16 + $0x48] sm:$0xff] %v1484
    %1650 = vst [vmem:[#allocation16 + $0x50] sm:$0xff] %v1486
    %1651 = vst [vmem:[#allocation16 + $0x58] sm:$0xff] %v1561
    %1652 = vst [vmem:[#allocation16 + $0x60] sm:$0xff] %v1563
    %1653 = vst.msk [vmem:[#allocation16 + $0x68] sm:$0xff] %vm287, %v1637
    // Predicated region
    $region102: #{autoencoder_forward.1} parent=1 // pred_check
      _
    $region103: #{autoencoder_forward.1} parent=1 // pred_check_branch
      %1655 = sbr.rel (0) target = $region105
    $region104: #{autoencoder_forward.1} parent=1 // pred_region
      _
    $region105: #{autoencoder_forward.1} parent=1 // pred_fallthru
      _
    // Predicated region
    $region106: #{autoencoder_forward.1} parent=1 // pred_check
      _
    $region107: #{autoencoder_forward.1} parent=1 // pred_check_branch
      %1657 = sbr.rel (0) target = $region109
    $region108: #{autoencoder_forward.1} parent=1 // pred_region
      %s1659 = ssub.s32 1792, 1792
      %1660 = vsyncadd [#allocation4], %s1659
      %s1661 = sshll.u32 [#allocation16], 4
      %s1662 = int_to_ptr.vmem [resolvable:$true] %s1661
      %1667 = dma.vmem_to_hbm [thread:$0]  %s1662, 1792, %s18, [#allocation4], 896, 896, 56
    $region109: #{autoencoder_forward.1} parent=1 // pred_fallthru
      _
    // Predicated region
    $region110: #{autoencoder_forward.1} parent=1 // pred_check
      _
    $region111: #{autoencoder_forward.1} parent=1 // pred_check_branch
      %1669 = sbr.rel (0) target = $region113
    $region112: #{autoencoder_forward.1} parent=1 // pred_region
      _
    $region113: #{autoencoder_forward.1} parent=1 // pred_fallthru
      _
    // Predicated region
    $region114: #{autoencoder_forward.1} parent=1 // pred_check
      _
    $region115: #{autoencoder_forward.1} parent=1 // pred_check_branch
      %1671 = sbr.rel (0) target = $region117
    $region116: #{autoencoder_forward.1} parent=1 // pred_region
      %1672 = dma.done [#allocation4], 1792
    $region117: #{autoencoder_forward.1} parent=1 // pred_fallthru
      _
    %1673 = vsyncpa [#allocation3], 1
    %1674 = vsyncpa [#allocation6], 1
    %1675 = vsyncpa [#allocation9], 1
    %1676 = vsyncpa [#allocation12], 1
    %1677 = vsyncpa [#allocation15], 1
    %1678 = vsyncpa [#allocation4], 1

</llo_original>
